<compile_context>
chip_gen: v7x
topology: tpu7x:2x2x1
jax: 0.10.0
libtpu: 0.0.40
codegen_flags: <defaults>
</compile_context>

<pallas_src>
import functools

import jax
import jax.numpy as jnp
from jax.experimental import pallas as pl
from jax.experimental.pallas import tpu as pltpu

BN_EPS = 1e-5


# ------------------------------ fused kernel --------------------------------

def _fused_kernel(x_ref, w1_ref, b1_ref, wpk_ref, bpk_ref,
                  out_ref, skip_ref, h1_ref, *, d2, d3p):
    f32 = jnp.float32
    bf16 = jnp.bfloat16
    j = pl.program_id(0)
    tn = w1_ref.shape[1]                      # static column-tile width

    # block1 (Linear + folded BN + ReLU), one column tile of the live outputs.
    h1_t = jnp.dot(x_ref[...], w1_ref[...], preferred_element_type=f32)
    h1_t = jnp.maximum(h1_t + b1_ref[...], 0.0)
    col0 = pl.multiple_of(j * tn, tn)
    h1_ref[:, pl.ds(col0, tn)] = h1_t.astype(bf16)

    # Dependent layers run once, after the full h1 row is resident in VMEM.
    @pl.when(j == pl.num_programs(0) - 1)
    def _epilogue():
        h1 = h1_ref[...]                                            # (1, d2) bf16

        # block2: Linear(d2, d2) [+ folded BN] + ReLU  -> skip connection
        h2 = jnp.dot(h1, wpk_ref[:, :d2], preferred_element_type=f32)
        h2 = jnp.maximum(h2 + bpk_ref[:, :d2], 0.0)
        skip_ref[...] = h2.astype(skip_ref.dtype)

        # TODO(synk): block3's Linear is d3->d3 but receives d2 features; take
        # the leading d3 (padded to d3p lanes; pad rows/cols/bias are zero).
        h3 = jnp.dot(h2[:, :d3p].astype(bf16), wpk_ref[:d3p, d2:d2 + d3p],
                     preferred_element_type=f32)
        h3 = jnp.maximum(h3 + bpk_ref[:, d2:d2 + d3p], 0.0)

        # lin: Linear(d2, d2) on the zero-padded h3; only the first d3 weight
        # rows are live (the rest are zero), so use the padded (d3p, d2) slab.
        out = jnp.dot(h3.astype(bf16), wpk_ref[:d3p, d2 + d3p:],
                      preferred_element_type=f32) + bpk_ref[:, d2 + d3p:]
        out_ref[...] = out.astype(out_ref.dtype)


# ----------------------------- parameter setup ------------------------------

def _linear_init(key, din, dout):
    kw, kb = jax.random.split(key)
    bound = 1.0 / (din ** 0.5)
    w = jax.random.uniform(kw, (dout, din), jnp.float32, -bound, bound)
    b = jax.random.uniform(kb, (dout,), jnp.float32, -bound, bound)
    return w, b


def _bn_init(d):
    # PyTorch BatchNorm1d default init: weight=1, bias=0, running stats (0, 1)
    return (jnp.ones((d,), jnp.float32), jnp.zeros((d,), jnp.float32),
            jnp.zeros((d,), jnp.float32), jnp.ones((d,), jnp.float32))


def _fold_bn(w, b, gamma, beta, mu, var):
    # eval-mode BN after Linear is affine:  y = s * (W x + b - mu) + beta
    s = gamma * jax.lax.rsqrt(var + BN_EPS)
    return w * s[:, None], s * (b - mu) + beta


def _pad_to(a, shape):
    return jnp.pad(a, [(0, t - s) for s, t in zip(a.shape, shape)])


def _dims(res_scaler, model_res):
    d1 = 4 * model_res * model_res
    d2 = d1 // res_scaler
    d3 = d2 // 2
    d3p = ((d3 + 127) // 128) * 128          # pad d3 to native 128-lane width
    return d1, d2, d3, d3p


def init_params(key, res_scaler, model_res):
    d1, d2, d3, d3p = _dims(res_scaler, model_res)
    # TODO(synk): configs with d1/d2 not multiples of 128 would need extra
    # zero-padding of the activations; not needed for typical model_res.
    assert d1 % 128 == 0 and d2 % 128 == 0 and d3p <= d2

    k1, k2, k3, kl = jax.random.split(key, 4)
    w1, b1 = _linear_init(k1, d1, d1)
    w2, b2 = _linear_init(k2, d2, d2)
    w3, b3 = _linear_init(k3, d3, d3)
    wl, bl = _linear_init(kl, d2, d2)

    g1, be1, mu1, var1 = _bn_init(d1)
    g2, be2, mu2, var2 = _bn_init(d2)
    g3, be3, mu3, var3 = _bn_init(d2)        # BN3 declared with d2 features (ref bug)

    w1f, b1f = _fold_bn(w1, b1, g1, be1, mu1, var1)
    w2f, b2f = _fold_bn(w2, b2, g2, be2, mu2, var2)
    # block3: only the first d3 BN parameters are ever used
    w3f, b3f = _fold_bn(w3, b3, g3[:d3], be3[:d3], mu3[:d3], var3[:d3])

    # block1: only the first d2 output features are consumed downstream
    # (forward slices h1[:, :d2]); trim dead rows -> res_scaler x less w1 traffic.
    w1t = jnp.asarray(w1f[:d2, :].T, dtype=jnp.bfloat16)            # (d1, d2)
    b1v = b1f[:d2].reshape(1, d2).astype(jnp.float32)

    # Pack the small dependent layers into one bf16 slab + one f32 bias row.
    w2t = w2f.T                                                     # (d2, d2)
    w3t = _pad_to(w3f.T, (d2, d3p))            # live block: (d3, d3)
    wlt = _pad_to(wl[:, :d3].T, (d2, d2))      # live rows:  (d3, d2)
    wpack = jnp.asarray(jnp.concatenate([w2t, w3t, wlt], axis=1), jnp.bfloat16)
    bpack = jnp.concatenate([b2f, _pad_to(b3f, (d3p,)), bl]
                            ).reshape(1, -1).astype(jnp.float32)

    return {"w1t": w1t, "b1": b1v, "wpack": wpack, "bpack": bpack}


# ------------------------------- forward pass --------------------------------

def _pick_tn(d1, d2):
    # 256-aligned tile (v6e/v7x MXU native) when it divides d2 and the
    # double-buffered w1 column stream stays small; 128 (v5e floor) otherwise.
    if d2 % 256 == 0 and d1 * 256 * 2 <= 8 * 1024 * 1024:
        return 256
    return 128


def _vmem_limit(d1, d2, d3p, tn):
    wcols = 2 * d2 + d3p
    need = 2 * (d1 * tn * 2)        # double-buffered w1 column tiles (bf16)
    need += 2 * (tn * 4)            # b1 tiles (f32)
    need += 2 * (d1 * 2)            # x (bf16)
    need += 2 * (d2 * wcols * 2)    # packed small weights (bf16)
    need += 2 * (wcols * 4)         # packed biases (f32)
    need += 2 * (2 * d2 * 4)        # out + skip (f32)
    need += d2 * 2                  # h1 scratch (bf16)
    need += 4 * 1024 * 1024         # compiler headroom
    # cap at 48 MiB so the kernel also fits v7x's 64 MiB physical VMEM
    return min(max(need, 16 * 1024 * 1024), 48 * 1024 * 1024)


def simple_restriction_forward(x, params, res_scaler, model_res):
    d1, d2, d3, d3p = _dims(res_scaler, model_res)
    new_size = model_res // res_scaler
    # TODO(synk): self.in_channels is never defined in __init__; use the only
    # value that makes the final view consistent (in_channels*new_size^2 == d2).
    in_channels = 4 * res_scaler

    v = x.reshape(1, -1).astype(jnp.bfloat16)   # x.view(-1), pre-cast on host
    assert v.shape[1] == d1

    tn = _pick_tn(d1, d2)
    wcols = 2 * d2 + d3p
    kernel = functools.partial(_fused_kernel, d2=d2, d3p=d3p)

    out, skip = pl.pallas_call(
        kernel,
        grid=(d2 // tn,),
        out_shape=(jax.ShapeDtypeStruct((1, d2), jnp.float32),
                   jax.ShapeDtypeStruct((1, d2), jnp.float32)),
        in_specs=[
            pl.BlockSpec((1, d1), lambda j: (0, 0)),       # x (resident)
            pl.BlockSpec((d1, tn), lambda j: (0, j)),      # w1 column stream
            pl.BlockSpec((1, tn), lambda j: (0, j)),       # b1 column stream
            pl.BlockSpec((d2, wcols), lambda j: (0, 0)),   # packed w2/w3/wl
            pl.BlockSpec((1, wcols), lambda j: (0, 0)),    # packed biases
        ],
        out_specs=(pl.BlockSpec((1, d2), lambda j: (0, 0)),
                   pl.BlockSpec((1, d2), lambda j: (0, 0))),
        scratch_shapes=[pltpu.VMEM((1, d2), jnp.bfloat16)],
        compiler_params=pltpu.CompilerParams(
            dimension_semantics=("arbitrary",),
            vmem_limit_bytes=_vmem_limit(d1, d2, d3p, tn)),
    )(v, params["w1t"], params["b1"], params["wpack"], params["bpack"])

    return out.reshape(in_channels, new_size, new_size), skip.reshape(d2)


forward_jit = jax.jit(simple_restriction_forward, static_argnums=(2, 3))


# ------------------------------------ main -----------------------------------

if __name__ == "__main__":
    res_scaler, model_res = 2, 16                      # small synthetic config
    d1 = 4 * model_res * model_res                     # 1024
    d2 = d1 // res_scaler                              # 512

    key = jax.random.PRNGKey(0)
    kx, kp = jax.random.split(key)
    # input implied by layer_size = 4*model_res*model_res : (4, model_res, model_res)
    x = jax.random.normal(kx, (4, model_res, model_res), jnp.float32)
    params = init_params(kp, res_scaler, model_res)

    out, skip = forward_jit(x, params, res_scaler, model_res)
    jax.block_until_ready((out, skip))

    assert out.shape == (4 * res_scaler,
                         model_res // res_scaler,
                         model_res // res_scaler), out.shape
    assert skip.shape == (d2,), skip.shape
    assert bool(jnp.all(jnp.isfinite(out))) and bool(jnp.all(jnp.isfinite(skip)))
    print("KERNEL_OK")
</pallas_src>

<mosaic_0001>
module attributes {stable_mosaic.version = 11 : i64} {
  func.func @_fused_kernel(%arg0: i32, %arg1: memref<1x1024xbf16, #tpu.memory_space<vmem>>, %arg2: memref<1024x256xbf16, #tpu.memory_space<vmem>>, %arg3: memref<1x256xf32, #tpu.memory_space<vmem>>, %arg4: memref<512x1280xbf16, #tpu.memory_space<vmem>>, %arg5: memref<1x1280xf32, #tpu.memory_space<vmem>>, %arg6: memref<1x512xf32, #tpu.memory_space<vmem>>, %arg7: memref<1x512xf32, #tpu.memory_space<vmem>>, %arg8: memref<1x512xbf16, #tpu.memory_space<vmem>>) attributes {dimension_semantics = [#tpu.dimension_semantics<arbitrary>], iteration_bounds = array<i64: 2>, scalar_prefetch = 0 : i64, scratch_operands = 1 : i64, tpu.core_type = #tpu.core_type<tc>, window_params = [{pipeline_mode = #tpu.pipeline_mode<synchronous>, transform_indices = @transform_0, window_bounds = array<i64: 1, 1024>}, {transform_indices = @transform_1, window_bounds = array<i64: 1024, 256>}, {transform_indices = @transform_2, window_bounds = array<i64: 1, 256>}, {pipeline_mode = #tpu.pipeline_mode<synchronous>, transform_indices = @transform_3, window_bounds = array<i64: 512, 1280>}, {pipeline_mode = #tpu.pipeline_mode<synchronous>, transform_indices = @transform_4, window_bounds = array<i64: 1, 1280>}, {pipeline_mode = #tpu.pipeline_mode<synchronous>, transform_indices = @transform_5, window_bounds = array<i64: 1, 512>}, {pipeline_mode = #tpu.pipeline_mode<synchronous>, transform_indices = @transform_6, window_bounds = array<i64: 1, 512>}]} {
    %c0 = arith.constant 0 : index
    %c0_0 = arith.constant 0 : index
    %0 = vector.load %arg1[%c0, %c0_0] : memref<1x1024xbf16, #tpu.memory_space<vmem>>, vector<1x1024xbf16>
    %c0_1 = arith.constant 0 : index
    %c0_2 = arith.constant 0 : index
    %1 = vector.load %arg2[%c0_1, %c0_2] : memref<1024x256xbf16, #tpu.memory_space<vmem>>, vector<1024x256xbf16>
    %cst = arith.constant dense<0.000000e+00> : vector<1x256xf32>
    %2 = tpu.matmul %0, %1, %cst {dimension_numbers = #tpu.dot_dimension_numbers<[1], [0], [0], [1], [0, 0, 1, 1], [], []>} : vector<1x1024xbf16>, vector<1024x256xbf16>, vector<1x256xf32> -> vector<1x256xf32>
    %c0_3 = arith.constant 0 : index
    %c0_4 = arith.constant 0 : index
    %3 = vector.load %arg3[%c0_3, %c0_4] : memref<1x256xf32, #tpu.memory_space<vmem>>, vector<1x256xf32>
    %4 = arith.addf %2, %3 : vector<1x256xf32>
    %cst_5 = arith.constant 0.000000e+00 : f32
    %5 = vector.broadcast %cst_5 : f32 to vector<1x256xf32>
    %6 = arith.maximumf %4, %5 : vector<1x256xf32>
    %c256_i32 = arith.constant 256 : i32
    %7 = arith.muli %arg0, %c256_i32 : i32
    %8 = tpu.assume_multiple %7, 256 : i32
    %9 = arith.truncf %6 : vector<1x256xf32> to vector<1x256xbf16>
    %c0_6 = arith.constant 0 : index
    %10 = arith.index_cast %8 : i32 to index
    %11 = vector.load %arg8[%c0_6, %10] : memref<1x512xbf16, #tpu.memory_space<vmem>>, vector<1x256xbf16>
    tpu.vector_store %arg8[%c0_6, %10], %9 {strides = array<i32>} : memref<1x512xbf16, #tpu.memory_space<vmem>>, vector<1x256xbf16>,
    %c1_i32 = arith.constant 1 : i32
    %12 = arith.cmpi eq, %arg0, %c1_i32 : i32
    %13 = arith.extui %12 : i1 to i32
    %c0_i32 = arith.constant 0 : i32
    %14 = arith.cmpi ne, %13, %c0_i32 : i32
    scf.if %14 {
      %c0_7 = arith.constant 0 : index
      %c0_8 = arith.constant 0 : index
      %15 = vector.load %arg8[%c0_7, %c0_8] : memref<1x512xbf16, #tpu.memory_space<vmem>>, vector<1x512xbf16>
      %c0_9 = arith.constant 0 : index
      %c0_10 = arith.constant 0 : index
      %16 = vector.load %arg4[%c0_9, %c0_10] : memref<512x1280xbf16, #tpu.memory_space<vmem>>, vector<512x512xbf16>
      %cst_11 = arith.constant dense<0.000000e+00> : vector<1x512xf32>
      %17 = tpu.matmul %15, %16, %cst_11 {dimension_numbers = #tpu.dot_dimension_numbers<[1], [0], [0], [1], [0, 0, 1, 1], [], []>} : vector<1x512xbf16>, vector<512x512xbf16>, vector<1x512xf32> -> vector<1x512xf32>
      %c0_12 = arith.constant 0 : index
      %c0_13 = arith.constant 0 : index
      %18 = vector.load %arg5[%c0_12, %c0_13] : memref<1x1280xf32, #tpu.memory_space<vmem>>, vector<1x512xf32>
      %19 = arith.addf %17, %18 : vector<1x512xf32>
      %cst_14 = arith.constant 0.000000e+00 : f32
      %20 = vector.broadcast %cst_14 : f32 to vector<1x512xf32>
      %21 = arith.maximumf %19, %20 : vector<1x512xf32>
      %c0_15 = arith.constant 0 : index
      %c0_16 = arith.constant 0 : index
      %22 = vector.load %arg7[%c0_15, %c0_16] : memref<1x512xf32, #tpu.memory_space<vmem>>, vector<1x512xf32>
      tpu.vector_store %arg7[%c0_15, %c0_16], %21 {strides = array<i32>} : memref<1x512xf32, #tpu.memory_space<vmem>>, vector<1x512xf32>,
      %23 = vector.extract_strided_slice %21 {offsets = [0, 0], sizes = [1, 256], strides = [1, 1]} : vector<1x512xf32> to vector<1x256xf32>
      %24 = arith.truncf %23 : vector<1x256xf32> to vector<1x256xbf16>
      %c0_17 = arith.constant 0 : index
      %c512 = arith.constant 512 : index
      %25 = vector.load %arg4[%c0_17, %c512] : memref<512x1280xbf16, #tpu.memory_space<vmem>>, vector<256x256xbf16>
      %cst_18 = arith.constant dense<0.000000e+00> : vector<1x256xf32>
      %26 = tpu.matmul %24, %25, %cst_18 {dimension_numbers = #tpu.dot_dimension_numbers<[1], [0], [0], [1], [0, 0, 1, 1], [], []>} : vector<1x256xbf16>, vector<256x256xbf16>, vector<1x256xf32> -> vector<1x256xf32>
      %c0_19 = arith.constant 0 : index
      %c512_20 = arith.constant 512 : index
      %27 = vector.load %arg5[%c0_19, %c512_20] : memref<1x1280xf32, #tpu.memory_space<vmem>>, vector<1x256xf32>
      %28 = arith.addf %26, %27 : vector<1x256xf32>
      %cst_21 = arith.constant 0.000000e+00 : f32
      %29 = vector.broadcast %cst_21 : f32 to vector<1x256xf32>
      %30 = arith.maximumf %28, %29 : vector<1x256xf32>
      %31 = arith.truncf %30 : vector<1x256xf32> to vector<1x256xbf16>
      %c0_22 = arith.constant 0 : index
      %c768 = arith.constant 768 : index
      %32 = vector.load %arg4[%c0_22, %c768] : memref<512x1280xbf16, #tpu.memory_space<vmem>>, vector<256x512xbf16>
      %cst_23 = arith.constant dense<0.000000e+00> : vector<1x512xf32>
      %33 = tpu.matmul %31, %32, %cst_23 {dimension_numbers = #tpu.dot_dimension_numbers<[1], [0], [0], [1], [0, 0, 1, 1], [], []>} : vector<1x256xbf16>, vector<256x512xbf16>, vector<1x512xf32> -> vector<1x512xf32>
      %c0_24 = arith.constant 0 : index
      %c768_25 = arith.constant 768 : index
      %34 = vector.load %arg5[%c0_24, %c768_25] : memref<1x1280xf32, #tpu.memory_space<vmem>>, vector<1x512xf32>
      %35 = arith.addf %33, %34 : vector<1x512xf32>
      %c0_26 = arith.constant 0 : index
      %c0_27 = arith.constant 0 : index
      %36 = vector.load %arg6[%c0_26, %c0_27] : memref<1x512xf32, #tpu.memory_space<vmem>>, vector<1x512xf32>
      tpu.vector_store %arg6[%c0_26, %c0_27], %35 {strides = array<i32>} : memref<1x512xf32, #tpu.memory_space<vmem>>, vector<1x512xf32>,
    } else {
    }
    return
  }
  func.func @transform_0(%arg0: i32) -> (i32, i32) {
    %c0_i32 = arith.constant 0 : i32
    %c0_i32_0 = arith.constant 0 : i32
    %c0_i32_1 = arith.constant 0 : i32
    return %c0_i32, %c0_i32_0 : i32, i32
  }
  func.func @transform_1(%arg0: i32) -> (i32, i32) {
    %c0_i32 = arith.constant 0 : i32
    %c0_i32_0 = arith.constant 0 : i32
    return %c0_i32, %arg0 : i32, i32
  }
  func.func @transform_2(%arg0: i32) -> (i32, i32) {
    %c0_i32 = arith.constant 0 : i32
    %c0_i32_0 = arith.constant 0 : i32
    return %c0_i32, %arg0 : i32, i32
  }
  func.func @transform_3(%arg0: i32) -> (i32, i32) {
    %c0_i32 = arith.constant 0 : i32
    %c0_i32_0 = arith.constant 0 : i32
    %c0_i32_1 = arith.constant 0 : i32
    return %c0_i32, %c0_i32_0 : i32, i32
  }
  func.func @transform_4(%arg0: i32) -> (i32, i32) {
    %c0_i32 = arith.constant 0 : i32
    %c0_i32_0 = arith.constant 0 : i32
    %c0_i32_1 = arith.constant 0 : i32
    return %c0_i32, %c0_i32_0 : i32, i32
  }
  func.func @transform_5(%arg0: i32) -> (i32, i32) {
    %c0_i32 = arith.constant 0 : i32
    %c0_i32_0 = arith.constant 0 : i32
    %c0_i32_1 = arith.constant 0 : i32
    return %c0_i32, %c0_i32_0 : i32, i32
  }
  func.func @transform_6(%arg0: i32) -> (i32, i32) {
    %c0_i32 = arith.constant 0 : i32
    %c0_i32_0 = arith.constant 0 : i32
    %c0_i32_1 = arith.constant 0 : i32
    return %c0_i32, %c0_i32_0 : i32, i32
  }
}

</mosaic_0001>

<llo_original>
// kernel: simple_restriction_forward.1
$region0: #{simple_restriction_forward.1}
  #allocation0 [shape = 'u32[]', space=smem, size = 0x4, offset = 0x4, fixed_abs, tag = 'smem constant byte address 0x4 - core index']
  #allocation1 [shape = 'u32[144,128]{1,0:T(1,128)}', space=vmem, size = 0x12000, scoped, tag = 'internal scratch']
  #allocation2 [shape = 'bf16[1,512]{1,0:T(2,128)(2,1)}', space=vmem, size = 0x800, scoped, tag = 'scratch operand']
  %s0 = inlined_call_operand.vmem [shape: bf16[1,1024], index: 0, kind: input, shape index: {}]
  %s1 = inlined_call_operand.hbm [shape: bf16[1024,512], index: 1, kind: input, shape index: {}]
  %s2 = inlined_call_operand.hbm [shape: f32[1,512], index: 2, kind: input, shape index: {}]
  %s3 = inlined_call_operand.hbm [shape: bf16[512,1280], index: 3, kind: input, shape index: {}]
  %s4 = inlined_call_operand.hbm [shape: f32[1,1280], index: 4, kind: input, shape index: {}]
  %s5 = inlined_call_operand.vmem [shape: f32[1,512], index: 5, kind: output, shape index: {0}]
  %s6 = inlined_call_operand.hbm [shape: f32[1,512], index: 6, kind: output, shape index: {1}]
  %7 = xla_tuple %s5, %s6
  %s8 = sld [smem:[#allocation0]]
  $region81: #{simple_restriction_forward.1} parent=0
    _
  %s10 = ssub.s32 1, %s8
  %s11 = scalar_select 0, %s10, %s8
  $region1: #{simple_restriction_forward.1} parent=0
    #allocation3 [shape = 'u8[1048576]{0}', space=vmem, size = 0x100000, scoped, tag = 'input window, operand 1']
    #allocation4 [shape = 's32[2]{0}', space=sflag, size = 0x8, scoped, tag = 'scoped memory for simple_restriction_forward.1']
    #allocation5 [shape = 's32[2]{0}', space=sflag, size = 0x8, scoped, tag = 'scoped memory for simple_restriction_forward.1']
    #allocation6 [shape = 'u8[2048]{0}', space=vmem, size = 0x800, scoped, tag = 'input window, operand 2']
    #allocation7 [shape = 's32[2]{0}', space=sflag, size = 0x8, scoped, tag = 'scoped memory for simple_restriction_forward.1']
    #allocation8 [shape = 'u8[1310720]{0}', space=vmem, size = 0x140000, scoped, tag = 'input window, operand 3, single buffered']
    #allocation9 [shape = 'u8[5120]{0}', space=vmem, size = 0x1400, scoped, tag = 'input window, operand 4, single buffered']
    #allocation10 [shape = 's32[1]{0}', space=sflag, size = 0x4, scoped, tag = 'scoped memory for simple_restriction_forward.1']
    #allocation11 [shape = 'u8[2048]{0}', space=vmem, size = 0x800, scoped, tag = 'output window, operand 1, single buffered']
    %12 = vsyncpa [#allocation4], 0
    %s13 = scalar_lea.sflag [#allocation4], 1
    %14 = vsyncpa %s13, 0
    %15 = vsyncpa [#allocation7], 0
    %s16 = scalar_lea.sflag [#allocation7], 1
    %17 = vsyncpa %s16, 0
    %18 = vsyncpa [#allocation10], 0
    %19 = vsyncpa [#allocation5], 0
    loop: start=0, step=1, limit=4
    $region2: #{simple_restriction_forward.1} parent=1 // loop_pre_header
      _
    $region3: #{simple_restriction_forward.1} parent=1 // loop_header
      %s21 = sphi 0, %s25
      %p22 = scmp.ge.s32.totalorder %s21, 4
      %s29 = sphi 0, %s29
      %s31 = sphi 0, %s29
      %s32 = sphi 0, %s31
      %s46 = sphi 0, %s32
      %s52 = sphi 0, %s54
      %s55 = sphi 0, %s52
      %s56 = sphi 0, %s55
      %s72 = sphi 0, %s56
      %s78 = sphi 0, %s80
      %s81 = sphi 0, %s78
      %s82 = sphi 0, %s81
      %s98 = sphi 0, %s82
      %s102 = sphi 0, %s102
      %s104 = sphi 0, %s102
      %s105 = sphi 0, %s104
      %s119 = sphi 0, %s105
      %s123 = sphi 0, %s123
      %s125 = sphi 0, %s123
      %s126 = sphi 0, %s125
      %s140 = sphi 0, %s126
      %s144 = sphi 0, %s144
      %s146 = sphi 0, %s144
      %s147 = sphi 0, %s146
      %s161 = sphi 0, %s147
      %s165 = sphi 0, %s165
      %s167 = sphi 0, %s165
      %s168 = sphi 0, %s167
      %s182 = sphi 0, %s168
    $region4: #{simple_restriction_forward.1} parent=1 // loop_header_branch
      %24 = sbr.rel (%p22) target = $region8
    $region5: #{simple_restriction_forward.1} parent=1 // loop_body
      %s26 = ssub.s32 %s21, 1
      %s27 = ssub.s32 %s21, 2
      %s28 = sadd.s32 %s21, 1
      %s30 = sadd.s32 %s29, 1
      %p33 = scmp.eq.s32.totalorder %s21, 1
      %p34 = scmp.ne.s32.totalorder %s29, %s31
      %p35 = scmp.eq.s32.totalorder %s21, 0
      %p36 = por %p34, %p35
      %p37 = scmp.ne.s32.totalorder %s29, %s31
      %p38 = scmp.eq.s32.totalorder %s26, 1
      %p39 = por %p37, %p38
      %p40 = scmp.ne.s32.totalorder %s31, %s32
      %p41 = scmp.eq.s32.totalorder %s26, 0
      %p42 = por %p40, %p41
      %p43 = scmp.ne.s32.totalorder %s31, %s32
      %p44 = scmp.eq.s32.totalorder %s27, 1
      %p45 = por %p43, %p44
      %p47 = scmp.ne.s32.totalorder %s32, %s46
      %p48 = scmp.eq.s32.totalorder %s27, 0
      %p49 = por %p47, %p48
      %s50 = ssub.s32 %s21, %s28
      %p51 = scmp.eq.s32.totalorder %s50, 0
      %s53 = sadd.s32 %s52, 1
      %s54 = scalar_select %p51, %s52, %s53
      %p57 = pneg %p51
      %p58 = scmp.eq.s32.totalorder %s21, 1
      %p59 = por %p57, %p58
      %p60 = scmp.ne.s32.totalorder %s52, %s55
      %p61 = scmp.eq.s32.totalorder %s21, 0
      %p62 = por %p60, %p61
      %p63 = scmp.ne.s32.totalorder %s52, %s55
      %p64 = scmp.eq.s32.totalorder %s26, 1
      %p65 = por %p63, %p64
      %p66 = scmp.ne.s32.totalorder %s55, %s56
      %p67 = scmp.eq.s32.totalorder %s26, 0
      %p68 = por %p66, %p67
      %p69 = scmp.ne.s32.totalorder %s55, %s56
      %p70 = scmp.eq.s32.totalorder %s27, 1
      %p71 = por %p69, %p70
      %p73 = scmp.ne.s32.totalorder %s56, %s72
      %p74 = scmp.eq.s32.totalorder %s27, 0
      %p75 = por %p73, %p74
      %s76 = ssub.s32 %s21, %s28
      %p77 = scmp.eq.s32.totalorder %s76, 0
      %s79 = sadd.s32 %s78, 1
      %s80 = scalar_select %p77, %s78, %s79
      %p83 = pneg %p77
      %p84 = scmp.eq.s32.totalorder %s21, 1
      %p85 = por %p83, %p84
      %p86 = scmp.ne.s32.totalorder %s78, %s81
      %p87 = scmp.eq.s32.totalorder %s21, 0
      %p88 = por %p86, %p87
      %p89 = scmp.ne.s32.totalorder %s78, %s81
      %p90 = scmp.eq.s32.totalorder %s26, 1
      %p91 = por %p89, %p90
      %p92 = scmp.ne.s32.totalorder %s81, %s82
      %p93 = scmp.eq.s32.totalorder %s26, 0
      %p94 = por %p92, %p93
      %p95 = scmp.ne.s32.totalorder %s81, %s82
      %p96 = scmp.eq.s32.totalorder %s27, 1
      %p97 = por %p95, %p96
      %p99 = scmp.ne.s32.totalorder %s82, %s98
      %p100 = scmp.eq.s32.totalorder %s27, 0
      %p101 = por %p99, %p100
      %s103 = sadd.s32 %s102, 1
      %p106 = scmp.eq.s32.totalorder %s21, 1
      %p107 = scmp.ne.s32.totalorder %s102, %s104
      %p108 = scmp.eq.s32.totalorder %s21, 0
      %p109 = por %p107, %p108
      %p110 = scmp.ne.s32.totalorder %s102, %s104
      %p111 = scmp.eq.s32.totalorder %s26, 1
      %p112 = por %p110, %p111
      %p113 = scmp.ne.s32.totalorder %s104, %s105
      %p114 = scmp.eq.s32.totalorder %s26, 0
      %p115 = por %p113, %p114
      %p116 = scmp.ne.s32.totalorder %s104, %s105
      %p117 = scmp.eq.s32.totalorder %s27, 1
      %p118 = por %p116, %p117
      %p120 = scmp.ne.s32.totalorder %s105, %s119
      %p121 = scmp.eq.s32.totalorder %s27, 0
      %p122 = por %p120, %p121
      %s124 = sadd.s32 %s123, 1
      %p127 = scmp.eq.s32.totalorder %s21, 1
      %p128 = scmp.ne.s32.totalorder %s123, %s125
      %p129 = scmp.eq.s32.totalorder %s21, 0
      %p130 = por %p128, %p129
      %p131 = scmp.ne.s32.totalorder %s123, %s125
      %p132 = scmp.eq.s32.totalorder %s26, 1
      %p133 = por %p131, %p132
      %p134 = scmp.ne.s32.totalorder %s125, %s126
      %p135 = scmp.eq.s32.totalorder %s26, 0
      %p136 = por %p134, %p135
      %p137 = scmp.ne.s32.totalorder %s125, %s126
      %p138 = scmp.eq.s32.totalorder %s27, 1
      %p139 = por %p137, %p138
      %p141 = scmp.ne.s32.totalorder %s126, %s140
      %p142 = scmp.eq.s32.totalorder %s27, 0
      %p143 = por %p141, %p142
      %s145 = sadd.s32 %s144, 1
      %p148 = scmp.eq.s32.totalorder %s21, 1
      %p149 = scmp.ne.s32.totalorder %s144, %s146
      %p150 = scmp.eq.s32.totalorder %s21, 0
      %p151 = por %p149, %p150
      %p152 = scmp.ne.s32.totalorder %s144, %s146
      %p153 = scmp.eq.s32.totalorder %s26, 1
      %p154 = por %p152, %p153
      %p155 = scmp.ne.s32.totalorder %s146, %s147
      %p156 = scmp.eq.s32.totalorder %s26, 0
      %p157 = por %p155, %p156
      %p158 = scmp.ne.s32.totalorder %s146, %s147
      %p159 = scmp.eq.s32.totalorder %s27, 1
      %p160 = por %p158, %p159
      %p162 = scmp.ne.s32.totalorder %s147, %s161
      %p163 = scmp.eq.s32.totalorder %s27, 0
      %p164 = por %p162, %p163
      %s166 = sadd.s32 %s165, 1
      %p169 = scmp.eq.s32.totalorder %s21, 1
      %p170 = scmp.ne.s32.totalorder %s165, %s167
      %p171 = scmp.eq.s32.totalorder %s21, 0
      %p172 = por %p170, %p171
      %p173 = scmp.ne.s32.totalorder %s165, %s167
      %p174 = scmp.eq.s32.totalorder %s26, 1
      %p175 = por %p173, %p174
      %p176 = scmp.ne.s32.totalorder %s167, %s168
      %p177 = scmp.eq.s32.totalorder %s26, 0
      %p178 = por %p176, %p177
      %p179 = scmp.ne.s32.totalorder %s167, %s168
      %p180 = scmp.eq.s32.totalorder %s27, 1
      %p181 = por %p179, %p180
      %p183 = scmp.ne.s32.totalorder %s168, %s182
      %p184 = scmp.eq.s32.totalorder %s27, 0
      %p185 = por %p183, %p184
      %p186 = scmp.le.s32.totalorder 1, %s21
      %p187 = scmp.lt.s32.totalorder %s21, 3
      %p188 = pnand %p186, %p187
      %p189 = pneg %p188
      // Predicated region
      $region9: #{simple_restriction_forward.1} parent=5 // pred_check
        _
      $region10: #{simple_restriction_forward.1} parent=5 // pred_check_branch
        %191 = sbr.rel (%p188) target = $region12
      $region11: #{simple_restriction_forward.1} parent=5 // pred_region
        %s192 = ssub.s32 %s21, 1
        // Predicated region
        $region13: #{simple_restriction_forward.1} parent=11 // pred_check
          %p193 = pneg %p42
        $region14: #{simple_restriction_forward.1} parent=11 // pred_check_branch
          %195 = sbr.rel (%p193) target = $region16
        $region15: #{simple_restriction_forward.1} parent=11 // pred_region
          _
        $region16: #{simple_restriction_forward.1} parent=11 // pred_fallthru
          _
        // Predicated region
        $region17: #{simple_restriction_forward.1} parent=11 // pred_check
          %p196 = pneg %p115
        $region18: #{simple_restriction_forward.1} parent=11 // pred_check_branch
          %198 = sbr.rel (%p196) target = $region20
        $region19: #{simple_restriction_forward.1} parent=11 // pred_region
          %s200 = ssub.s32 40960, 40960
          %201 = vsyncadd [#allocation7], %s200
          %s202 = sshll.u32 [#allocation8], 4
          %s203 = int_to_ptr.vmem [resolvable:$true] %s202
          %208 = dma.hbm_to_vmem [thread:$0]  %s3, 40960, %s203, [#allocation7], 640, 640, 40
        $region20: #{simple_restriction_forward.1} parent=11 // pred_fallthru
          _
        // Predicated region
        $region21: #{simple_restriction_forward.1} parent=11 // pred_check
          %p209 = pneg %p136
        $region22: #{simple_restriction_forward.1} parent=11 // pred_check_branch
          %211 = sbr.rel (%p209) target = $region24
        $region23: #{simple_restriction_forward.1} parent=11 // pred_region
          %s213 = ssub.s32 160, 160
          %214 = vsyncadd [#allocation10], %s213
          %s216 = sshll.u32 [#allocation9], 4
          %s217 = int_to_ptr.vmem [resolvable:$true] %s216
          %219 = dma.hbm_to_vmem [thread:$0]  %s4, 160, %s217, [#allocation10]
        $region24: #{simple_restriction_forward.1} parent=11 // pred_fallthru
          _
      $region12: #{simple_restriction_forward.1} parent=5 // pred_fallthru
        _
      %p220 = scmp.lt.s32.totalorder %s21, 2
      // Predicated region
      $region25: #{simple_restriction_forward.1} parent=5 // pred_check
        %p221 = pneg %p220
      $region26: #{simple_restriction_forward.1} parent=5 // pred_check_branch
        %223 = sbr.rel (%p221) target = $region28
      $region27: #{simple_restriction_forward.1} parent=5 // pred_region
        // Predicated region
        $region29: #{simple_restriction_forward.1} parent=27 // pred_check
          %p224 = pneg %p62
        $region30: #{simple_restriction_forward.1} parent=27 // pred_check_branch
          %226 = sbr.rel (%p224) target = $region32
        $region31: #{simple_restriction_forward.1} parent=27 // pred_region
          %s227 = sand.u32 %s52, 1
          %s228 = scalar_lea.sflag [#allocation4], %s227
          %s229 = sand.u32 %s52, 1
          %s230 = smul.addr %s229, 1024
          %s231 = scalar_lea.vmem [#allocation3], %s230
          %s232 = smul.u32 2, %s21
          %s234 = ssub.s32 16384, 16384
          %235 = vsyncadd %s228, %s234
          %s236 = smul.addr %s232, 64
          %s237 = scalar_lea.hbm %s1, %s236
          %s238 = sshll.u32 %s231, 4
          %s239 = int_to_ptr.vmem [resolvable:$true] %s238
          %244 = dma.hbm_to_vmem [thread:$0]  %s237, 16384, %s239, %s228, 256, 128, 8
        $region32: #{simple_restriction_forward.1} parent=27 // pred_fallthru
          _
        // Predicated region
        $region33: #{simple_restriction_forward.1} parent=27 // pred_check
          %p245 = pneg %p88
        $region34: #{simple_restriction_forward.1} parent=27 // pred_check_branch
          %247 = sbr.rel (%p245) target = $region36
        $region35: #{simple_restriction_forward.1} parent=27 // pred_region
          %s248 = sand.u32 %s21, 1
          %s249 = scalar_lea.sflag [#allocation7], %s248
          %s250 = sand.u32 %s78, 1
          %s251 = smul.addr %s250, 2
          %s252 = scalar_lea.vmem [#allocation6], %s251
          %s253 = smul.u32 2, %s21
          %s255 = ssub.s32 32, 32
          %256 = vsyncadd %s249, %s255
          %s257 = smul.addr %s253, 16
          %s258 = scalar_lea.hbm %s2, %s257
          %s260 = sshll.u32 %s252, 4
          %s261 = int_to_ptr.vmem [resolvable:$true] %s260
          %263 = dma.hbm_to_vmem [thread:$0]  %s258, 32, %s261, %s249
        $region36: #{simple_restriction_forward.1} parent=27 // pred_fallthru
          _
      $region28: #{simple_restriction_forward.1} parent=5 // pred_fallthru
        _
      %p264 = scmp.le.s32.totalorder 1, %s21
      %p265 = scmp.lt.s32.totalorder %s21, 3
      %p266 = pnand %p264, %p265
      %p267 = pneg %p266
      // Predicated region
      $region37: #{simple_restriction_forward.1} parent=5 // pred_check
        _
      $region38: #{simple_restriction_forward.1} parent=5 // pred_check_branch
        %269 = sbr.rel (%p266) target = $region40
      $region39: #{simple_restriction_forward.1} parent=5 // pred_region
        %s270 = ssub.s32 %s21, 1
        %s271 = sand.u32 %s55, 1
        %s272 = scalar_lea.sflag [#allocation4], %s271
        %s273 = sand.u32 %s55, 1
        %s274 = smul.addr %s273, 1024
        %s275 = scalar_lea.vmem [#allocation3], %s274
        // Predicated region
        $region41: #{simple_restriction_forward.1} parent=39 // pred_check
          %p276 = pneg %p68
        $region42: #{simple_restriction_forward.1} parent=39 // pred_check_branch
          %278 = sbr.rel (%p276) target = $region44
        $region43: #{simple_restriction_forward.1} parent=39 // pred_region
          %279 = dma.done %s272, 16384
        $region44: #{simple_restriction_forward.1} parent=39 // pred_fallthru
          _
        %s280 = sand.u32 %s26, 1
        %s281 = scalar_lea.sflag [#allocation7], %s280
        %s282 = sand.u32 %s81, 1
        %s283 = smul.addr %s282, 2
        %s284 = scalar_lea.vmem [#allocation6], %s283
        // Predicated region
        $region45: #{simple_restriction_forward.1} parent=39 // pred_check
          %p285 = pneg %p94
        $region46: #{simple_restriction_forward.1} parent=39 // pred_check_branch
          %287 = sbr.rel (%p285) target = $region48
        $region47: #{simple_restriction_forward.1} parent=39 // pred_region
          %288 = dma.done %s281, 32
        $region48: #{simple_restriction_forward.1} parent=39 // pred_fallthru
          _
        // Predicated region
        $region49: #{simple_restriction_forward.1} parent=39 // pred_check
          %p289 = pneg %p115
        $region50: #{simple_restriction_forward.1} parent=39 // pred_check_branch
          %291 = sbr.rel (%p289) target = $region52
        $region51: #{simple_restriction_forward.1} parent=39 // pred_region
          %292 = dma.done [#allocation7], 40960
        $region52: #{simple_restriction_forward.1} parent=39 // pred_fallthru
          _
        // Predicated region
        $region53: #{simple_restriction_forward.1} parent=39 // pred_check
          %p293 = pneg %p136
        $region54: #{simple_restriction_forward.1} parent=39 // pred_check_branch
          %295 = sbr.rel (%p293) target = $region56
        $region55: #{simple_restriction_forward.1} parent=39 // pred_region
          %296 = dma.done [#allocation10], 160
        $region56: #{simple_restriction_forward.1} parent=39 // pred_fallthru
          _
        %p297 = pneg %p42
        %p298 = pneg %p39
        %s299 = sand.u32 %s55, 1
        %s300 = scalar_lea.sflag [#allocation4], %s299
        %s301 = sand.u32 %s55, 1
        %s302 = smul.addr %s301, 1024
        %s303 = scalar_lea.vmem [#allocation3], %s302
        %p304 = pneg %p68
        %p305 = pneg %p65
        %s306 = sand.u32 %s26, 1
        %s307 = scalar_lea.sflag [#allocation7], %s306
        %s308 = sand.u32 %s81, 1
        %s309 = smul.addr %s308, 2
        %s310 = scalar_lea.vmem [#allocation6], %s309
        %p311 = pneg %p94
        %p312 = pneg %p91
        %p313 = pneg %p115
        %p314 = pneg %p112
        %p315 = pneg %p136
        %p316 = pneg %p133
        %p317 = pneg %p157
        %p318 = pneg %p154
        %p319 = pneg %p178
        %p320 = pneg %p175
        %s321 = smul.u32 2, %s26
        %s322 = smul.u32 2, %s26
        %v323 = vld [vmem:[%s0] sm:$0xff]
        %v324 = vld [vmem:[%s275] sm:$0xff]
        %v325 = vld [vmem:[%s275 + $0x8] sm:$0xff]
        %v326 = vld [vmem:[%s275 + $0x10] sm:$0xff]
        %v327 = vld [vmem:[%s275 + $0x18] sm:$0xff]
        %v328 = vld [vmem:[%s275 + $0x20] sm:$0xff]
        %v329 = vld [vmem:[%s275 + $0x28] sm:$0xff]
        %v330 = vld [vmem:[%s275 + $0x30] sm:$0xff]
        %v331 = vld [vmem:[%s275 + $0x38] sm:$0xff]
        %v332 = vld [vmem:[%s275 + $0x40] sm:$0xff]
        %v333 = vld [vmem:[%s275 + $0x48] sm:$0xff]
        %v334 = vld [vmem:[%s275 + $0x50] sm:$0xff]
        %v335 = vld [vmem:[%s275 + $0x58] sm:$0xff]
        %v336 = vld [vmem:[%s275 + $0x60] sm:$0xff]
        %v337 = vld [vmem:[%s275 + $0x68] sm:$0xff]
        %v338 = vld [vmem:[%s275 + $0x70] sm:$0xff]
        %v339 = vld [vmem:[%s275 + $0x78] sm:$0xff]
        %v340 = vld [vmem:[%s275 + $0x80] sm:$0xff]
        %v341 = vld [vmem:[%s275 + $0x88] sm:$0xff]
        %v342 = vld [vmem:[%s275 + $0x90] sm:$0xff]
        %v343 = vld [vmem:[%s275 + $0x98] sm:$0xff]
        %v344 = vld [vmem:[%s275 + $0xa0] sm:$0xff]
        %v345 = vld [vmem:[%s275 + $0xa8] sm:$0xff]
        %v346 = vld [vmem:[%s275 + $0xb0] sm:$0xff]
        %v347 = vld [vmem:[%s275 + $0xb8] sm:$0xff]
        %v348 = vld [vmem:[%s275 + $0xc0] sm:$0xff]
        %v349 = vld [vmem:[%s275 + $0xc8] sm:$0xff]
        %v350 = vld [vmem:[%s275 + $0xd0] sm:$0xff]
        %v351 = vld [vmem:[%s275 + $0xd8] sm:$0xff]
        %v352 = vld [vmem:[%s275 + $0xe0] sm:$0xff]
        %v353 = vld [vmem:[%s275 + $0xe8] sm:$0xff]
        %v354 = vld [vmem:[%s275 + $0xf0] sm:$0xff]
        %v355 = vld [vmem:[%s275 + $0xf8] sm:$0xff]
        %v356 = vld [vmem:[%s275 + $0x100] sm:$0xff]
        %v357 = vld [vmem:[%s275 + $0x108] sm:$0xff]
        %v358 = vld [vmem:[%s275 + $0x110] sm:$0xff]
        %v359 = vld [vmem:[%s275 + $0x118] sm:$0xff]
        %v360 = vld [vmem:[%s275 + $0x120] sm:$0xff]
        %v361 = vld [vmem:[%s275 + $0x128] sm:$0xff]
        %v362 = vld [vmem:[%s275 + $0x130] sm:$0xff]
        %v363 = vld [vmem:[%s275 + $0x138] sm:$0xff]
        %v364 = vld [vmem:[%s275 + $0x140] sm:$0xff]
        %v365 = vld [vmem:[%s275 + $0x148] sm:$0xff]
        %v366 = vld [vmem:[%s275 + $0x150] sm:$0xff]
        %v367 = vld [vmem:[%s275 + $0x158] sm:$0xff]
        %v368 = vld [vmem:[%s275 + $0x160] sm:$0xff]
        %v369 = vld [vmem:[%s275 + $0x168] sm:$0xff]
        %v370 = vld [vmem:[%s275 + $0x170] sm:$0xff]
        %v371 = vld [vmem:[%s275 + $0x178] sm:$0xff]
        %v372 = vld [vmem:[%s275 + $0x180] sm:$0xff]
        %v373 = vld [vmem:[%s275 + $0x188] sm:$0xff]
        %v374 = vld [vmem:[%s275 + $0x190] sm:$0xff]
        %v375 = vld [vmem:[%s275 + $0x198] sm:$0xff]
        %v376 = vld [vmem:[%s275 + $0x1a0] sm:$0xff]
        %v377 = vld [vmem:[%s275 + $0x1a8] sm:$0xff]
        %v378 = vld [vmem:[%s275 + $0x1b0] sm:$0xff]
        %v379 = vld [vmem:[%s275 + $0x1b8] sm:$0xff]
        %v380 = vld [vmem:[%s275 + $0x1c0] sm:$0xff]
        %v381 = vld [vmem:[%s275 + $0x1c8] sm:$0xff]
        %v382 = vld [vmem:[%s275 + $0x1d0] sm:$0xff]
        %v383 = vld [vmem:[%s275 + $0x1d8] sm:$0xff]
        %v384 = vld [vmem:[%s275 + $0x1e0] sm:$0xff]
        %v385 = vld [vmem:[%s275 + $0x1e8] sm:$0xff]
        %v386 = vld [vmem:[%s275 + $0x1f0] sm:$0xff]
        %v387 = vld [vmem:[%s275 + $0x1f8] sm:$0xff]
        %v388 = vld [vmem:[%s275 + $0x200] sm:$0xff]
        %v389 = vld [vmem:[%s275 + $0x208] sm:$0xff]
        %v390 = vld [vmem:[%s275 + $0x210] sm:$0xff]
        %v391 = vld [vmem:[%s275 + $0x218] sm:$0xff]
        %v392 = vld [vmem:[%s275 + $0x220] sm:$0xff]
        %v393 = vld [vmem:[%s275 + $0x228] sm:$0xff]
        %v394 = vld [vmem:[%s275 + $0x230] sm:$0xff]
        %v395 = vld [vmem:[%s275 + $0x238] sm:$0xff]
        %v396 = vld [vmem:[%s275 + $0x240] sm:$0xff]
        %v397 = vld [vmem:[%s275 + $0x248] sm:$0xff]
        %v398 = vld [vmem:[%s275 + $0x250] sm:$0xff]
        %v399 = vld [vmem:[%s275 + $0x258] sm:$0xff]
        %v400 = vld [vmem:[%s275 + $0x260] sm:$0xff]
        %v401 = vld [vmem:[%s275 + $0x268] sm:$0xff]
        %v402 = vld [vmem:[%s275 + $0x270] sm:$0xff]
        %v403 = vld [vmem:[%s275 + $0x278] sm:$0xff]
        %v404 = vld [vmem:[%s275 + $0x280] sm:$0xff]
        %v405 = vld [vmem:[%s275 + $0x288] sm:$0xff]
        %v406 = vld [vmem:[%s275 + $0x290] sm:$0xff]
        %v407 = vld [vmem:[%s275 + $0x298] sm:$0xff]
        %v408 = vld [vmem:[%s275 + $0x2a0] sm:$0xff]
        %v409 = vld [vmem:[%s275 + $0x2a8] sm:$0xff]
        %v410 = vld [vmem:[%s275 + $0x2b0] sm:$0xff]
        %v411 = vld [vmem:[%s275 + $0x2b8] sm:$0xff]
        %v412 = vld [vmem:[%s275 + $0x2c0] sm:$0xff]
        %v413 = vld [vmem:[%s275 + $0x2c8] sm:$0xff]
        %v414 = vld [vmem:[%s275 + $0x2d0] sm:$0xff]
        %v415 = vld [vmem:[%s275 + $0x2d8] sm:$0xff]
        %v416 = vld [vmem:[%s275 + $0x2e0] sm:$0xff]
        %v417 = vld [vmem:[%s275 + $0x2e8] sm:$0xff]
        %v418 = vld [vmem:[%s275 + $0x2f0] sm:$0xff]
        %v419 = vld [vmem:[%s275 + $0x2f8] sm:$0xff]
        %v420 = vld [vmem:[%s275 + $0x300] sm:$0xff]
        %v421 = vld [vmem:[%s275 + $0x308] sm:$0xff]
        %v422 = vld [vmem:[%s275 + $0x310] sm:$0xff]
        %v423 = vld [vmem:[%s275 + $0x318] sm:$0xff]
        %v424 = vld [vmem:[%s275 + $0x320] sm:$0xff]
        %v425 = vld [vmem:[%s275 + $0x328] sm:$0xff]
        %v426 = vld [vmem:[%s275 + $0x330] sm:$0xff]
        %v427 = vld [vmem:[%s275 + $0x338] sm:$0xff]
        %v428 = vld [vmem:[%s275 + $0x340] sm:$0xff]
        %v429 = vld [vmem:[%s275 + $0x348] sm:$0xff]
        %v430 = vld [vmem:[%s275 + $0x350] sm:$0xff]
        %v431 = vld [vmem:[%s275 + $0x358] sm:$0xff]
        %v432 = vld [vmem:[%s275 + $0x360] sm:$0xff]
        %v433 = vld [vmem:[%s275 + $0x368] sm:$0xff]
        %v434 = vld [vmem:[%s275 + $0x370] sm:$0xff]
        %v435 = vld [vmem:[%s275 + $0x378] sm:$0xff]
        %v436 = vld [vmem:[%s275 + $0x380] sm:$0xff]
        %v437 = vld [vmem:[%s275 + $0x388] sm:$0xff]
        %v438 = vld [vmem:[%s275 + $0x390] sm:$0xff]
        %v439 = vld [vmem:[%s275 + $0x398] sm:$0xff]
        %v440 = vld [vmem:[%s275 + $0x3a0] sm:$0xff]
        %v441 = vld [vmem:[%s275 + $0x3a8] sm:$0xff]
        %v442 = vld [vmem:[%s275 + $0x3b0] sm:$0xff]
        %v443 = vld [vmem:[%s275 + $0x3b8] sm:$0xff]
        %v444 = vld [vmem:[%s275 + $0x3c0] sm:$0xff]
        %v445 = vld [vmem:[%s275 + $0x3c8] sm:$0xff]
        %v446 = vld [vmem:[%s275 + $0x3d0] sm:$0xff]
        %v447 = vld [vmem:[%s275 + $0x3d8] sm:$0xff]
        %v448 = vld [vmem:[%s275 + $0x3e0] sm:$0xff]
        %v449 = vld [vmem:[%s275 + $0x3e8] sm:$0xff]
        %v450 = vld [vmem:[%s275 + $0x3f0] sm:$0xff]
        %v451 = vld [vmem:[%s275 + $0x3f8] sm:$0xff]
        %v452 = vld [vmem:[%s284] sm:$0x3]
        %v454 = vcombine.high %v323, %v323
        %v456 = vunpack.c.l.s4 1966171168
        %v457 = vunpack.c.0.s8 %v456
        %v458 = vlaneseq
        %v459 = vshrl.u32 %v458, 7
        %v460 = vsub.s32 %v457, %v459
        %v461 = vrot.slane %v323, %v460
        %v463 = vunpack.c.l.s4 1966171168
        %v464 = vunpack.c.0.s8 %v463
        %v465 = vlaneseq
        %v466 = vshrl.u32 %v465, 7
        %v467 = vsub.s32 %v464, %v466
        %v468 = vrot.slane %v454, %v467
        %v469 = vcombine.high %v461, %v461
        %v470 = vcombine.high %v468, %v468
        %v472 = vunpack.c.l.s4 1966171168
        %v473 = vunpack.c.0.s8 %v472
        %v474 = vlaneseq
        %v475 = vshrl.u32 %v474, 7
        %v476 = vsub.s32 %v473, %v475
        %v477 = vrot.slane %v461, %v476
        %v479 = vunpack.c.l.s4 1966171168
        %v480 = vunpack.c.0.s8 %v479
        %v481 = vlaneseq
        %v482 = vshrl.u32 %v481, 7
        %v483 = vsub.s32 %v480, %v482
        %v484 = vrot.slane %v468, %v483
        %v486 = vunpack.c.l.s4 1966171168
        %v487 = vunpack.c.0.s8 %v486
        %v488 = vlaneseq
        %v489 = vshrl.u32 %v488, 7
        %v490 = vsub.s32 %v487, %v489
        %v491 = vrot.slane %v469, %v490
        %v493 = vunpack.c.l.s4 1966171168
        %v494 = vunpack.c.0.s8 %v493
        %v495 = vlaneseq
        %v496 = vshrl.u32 %v495, 7
        %v497 = vsub.s32 %v494, %v496
        %v498 = vrot.slane %v470, %v497
        %v499 = vcombine.high %v477, %v477
        %v500 = vcombine.high %v484, %v484
        %v501 = vcombine.high %v491, %v491
        %v502 = vcombine.high %v498, %v498
        %v639 = vunpack.c.l.b16 %v324
        %v640 = vunpack.c.h.b16 %v324
        %v641 = vunpack.c.l.b16 %v325
        %v642 = vunpack.c.h.b16 %v325
        %v643 = vunpack.c.l.b16 %v326
        %v644 = vunpack.c.h.b16 %v326
        %v645 = vunpack.c.l.b16 %v327
        %v646 = vunpack.c.h.b16 %v327
        %v647 = vunpack.c.l.b16 %v328
        %v648 = vunpack.c.h.b16 %v328
        %v649 = vunpack.c.l.b16 %v329
        %v650 = vunpack.c.h.b16 %v329
        %v651 = vunpack.c.l.b16 %v330
        %v652 = vunpack.c.h.b16 %v330
        %v653 = vunpack.c.l.b16 %v331
        %v654 = vunpack.c.h.b16 %v331
        %v655 = vunpack.c.l.b16 %v332
        %v656 = vunpack.c.h.b16 %v332
        %v657 = vunpack.c.l.b16 %v333
        %v658 = vunpack.c.h.b16 %v333
        %v659 = vunpack.c.l.b16 %v334
        %v660 = vunpack.c.h.b16 %v334
        %v661 = vunpack.c.l.b16 %v335
        %v662 = vunpack.c.h.b16 %v335
        %v663 = vunpack.c.l.b16 %v336
        %v664 = vunpack.c.h.b16 %v336
        %v665 = vunpack.c.l.b16 %v337
        %v666 = vunpack.c.h.b16 %v337
        %v667 = vunpack.c.l.b16 %v338
        %v668 = vunpack.c.h.b16 %v338
        %v669 = vunpack.c.l.b16 %v339
        %v670 = vunpack.c.h.b16 %v339
        %v671 = vunpack.c.l.b16 %v340
        %v672 = vunpack.c.h.b16 %v340
        %v673 = vunpack.c.l.b16 %v341
        %v674 = vunpack.c.h.b16 %v341
        %v675 = vunpack.c.l.b16 %v342
        %v676 = vunpack.c.h.b16 %v342
        %v677 = vunpack.c.l.b16 %v343
        %v678 = vunpack.c.h.b16 %v343
        %v679 = vunpack.c.l.b16 %v344
        %v680 = vunpack.c.h.b16 %v344
        %v681 = vunpack.c.l.b16 %v345
        %v682 = vunpack.c.h.b16 %v345
        %v683 = vunpack.c.l.b16 %v346
        %v684 = vunpack.c.h.b16 %v346
        %v685 = vunpack.c.l.b16 %v347
        %v686 = vunpack.c.h.b16 %v347
        %v687 = vunpack.c.l.b16 %v348
        %v688 = vunpack.c.h.b16 %v348
        %v689 = vunpack.c.l.b16 %v349
        %v690 = vunpack.c.h.b16 %v349
        %v691 = vunpack.c.l.b16 %v350
        %v692 = vunpack.c.h.b16 %v350
        %v693 = vunpack.c.l.b16 %v351
        %v694 = vunpack.c.h.b16 %v351
        %v695 = vunpack.c.l.b16 %v352
        %v696 = vunpack.c.h.b16 %v352
        %v697 = vunpack.c.l.b16 %v353
        %v698 = vunpack.c.h.b16 %v353
        %v699 = vunpack.c.l.b16 %v354
        %v700 = vunpack.c.h.b16 %v354
        %v701 = vunpack.c.l.b16 %v355
        %v702 = vunpack.c.h.b16 %v355
        %v703 = vunpack.c.l.b16 %v356
        %v704 = vunpack.c.h.b16 %v356
        %v705 = vunpack.c.l.b16 %v357
        %v706 = vunpack.c.h.b16 %v357
        %v707 = vunpack.c.l.b16 %v358
        %v708 = vunpack.c.h.b16 %v358
        %v709 = vunpack.c.l.b16 %v359
        %v710 = vunpack.c.h.b16 %v359
        %v711 = vunpack.c.l.b16 %v360
        %v712 = vunpack.c.h.b16 %v360
        %v713 = vunpack.c.l.b16 %v361
        %v714 = vunpack.c.h.b16 %v361
        %v715 = vunpack.c.l.b16 %v362
        %v716 = vunpack.c.h.b16 %v362
        %v717 = vunpack.c.l.b16 %v363
        %v718 = vunpack.c.h.b16 %v363
        %v719 = vunpack.c.l.b16 %v364
        %v720 = vunpack.c.h.b16 %v364
        %v721 = vunpack.c.l.b16 %v365
        %v722 = vunpack.c.h.b16 %v365
        %v723 = vunpack.c.l.b16 %v366
        %v724 = vunpack.c.h.b16 %v366
        %v725 = vunpack.c.l.b16 %v367
        %v726 = vunpack.c.h.b16 %v367
        %v727 = vunpack.c.l.b16 %v368
        %v728 = vunpack.c.h.b16 %v368
        %v729 = vunpack.c.l.b16 %v369
        %v730 = vunpack.c.h.b16 %v369
        %v731 = vunpack.c.l.b16 %v370
        %v732 = vunpack.c.h.b16 %v370
        %v733 = vunpack.c.l.b16 %v371
        %v734 = vunpack.c.h.b16 %v371
        %v735 = vunpack.c.l.b16 %v372
        %v736 = vunpack.c.h.b16 %v372
        %v737 = vunpack.c.l.b16 %v373
        %v738 = vunpack.c.h.b16 %v373
        %v739 = vunpack.c.l.b16 %v374
        %v740 = vunpack.c.h.b16 %v374
        %v741 = vunpack.c.l.b16 %v375
        %v742 = vunpack.c.h.b16 %v375
        %v743 = vunpack.c.l.b16 %v376
        %v744 = vunpack.c.h.b16 %v376
        %v745 = vunpack.c.l.b16 %v377
        %v746 = vunpack.c.h.b16 %v377
        %v747 = vunpack.c.l.b16 %v378
        %v748 = vunpack.c.h.b16 %v378
        %v749 = vunpack.c.l.b16 %v379
        %v750 = vunpack.c.h.b16 %v379
        %v751 = vunpack.c.l.b16 %v380
        %v752 = vunpack.c.h.b16 %v380
        %v753 = vunpack.c.l.b16 %v381
        %v754 = vunpack.c.h.b16 %v381
        %v755 = vunpack.c.l.b16 %v382
        %v756 = vunpack.c.h.b16 %v382
        %v757 = vunpack.c.l.b16 %v383
        %v758 = vunpack.c.h.b16 %v383
        %v759 = vunpack.c.l.b16 %v384
        %v760 = vunpack.c.h.b16 %v384
        %v761 = vunpack.c.l.b16 %v385
        %v762 = vunpack.c.h.b16 %v385
        %v763 = vunpack.c.l.b16 %v386
        %v764 = vunpack.c.h.b16 %v386
        %v765 = vunpack.c.l.b16 %v387
        %v766 = vunpack.c.h.b16 %v387
        %v767 = vunpack.c.l.b16 %v388
        %v768 = vunpack.c.h.b16 %v388
        %v769 = vunpack.c.l.b16 %v389
        %v770 = vunpack.c.h.b16 %v389
        %v771 = vunpack.c.l.b16 %v390
        %v772 = vunpack.c.h.b16 %v390
        %v773 = vunpack.c.l.b16 %v391
        %v774 = vunpack.c.h.b16 %v391
        %v775 = vunpack.c.l.b16 %v392
        %v776 = vunpack.c.h.b16 %v392
        %v777 = vunpack.c.l.b16 %v393
        %v778 = vunpack.c.h.b16 %v393
        %v779 = vunpack.c.l.b16 %v394
        %v780 = vunpack.c.h.b16 %v394
        %v781 = vunpack.c.l.b16 %v395
        %v782 = vunpack.c.h.b16 %v395
        %v783 = vunpack.c.l.b16 %v396
        %v784 = vunpack.c.h.b16 %v396
        %v785 = vunpack.c.l.b16 %v397
        %v786 = vunpack.c.h.b16 %v397
        %v787 = vunpack.c.l.b16 %v398
        %v788 = vunpack.c.h.b16 %v398
        %v789 = vunpack.c.l.b16 %v399
        %v790 = vunpack.c.h.b16 %v399
        %v791 = vunpack.c.l.b16 %v400
        %v792 = vunpack.c.h.b16 %v400
        %v793 = vunpack.c.l.b16 %v401
        %v794 = vunpack.c.h.b16 %v401
        %v795 = vunpack.c.l.b16 %v402
        %v796 = vunpack.c.h.b16 %v402
        %v797 = vunpack.c.l.b16 %v403
        %v798 = vunpack.c.h.b16 %v403
        %v799 = vunpack.c.l.b16 %v404
        %v800 = vunpack.c.h.b16 %v404
        %v801 = vunpack.c.l.b16 %v405
        %v802 = vunpack.c.h.b16 %v405
        %v803 = vunpack.c.l.b16 %v406
        %v804 = vunpack.c.h.b16 %v406
        %v805 = vunpack.c.l.b16 %v407
        %v806 = vunpack.c.h.b16 %v407
        %v807 = vunpack.c.l.b16 %v408
        %v808 = vunpack.c.h.b16 %v408
        %v809 = vunpack.c.l.b16 %v409
        %v810 = vunpack.c.h.b16 %v409
        %v811 = vunpack.c.l.b16 %v410
        %v812 = vunpack.c.h.b16 %v410
        %v813 = vunpack.c.l.b16 %v411
        %v814 = vunpack.c.h.b16 %v411
        %v815 = vunpack.c.l.b16 %v412
        %v816 = vunpack.c.h.b16 %v412
        %v817 = vunpack.c.l.b16 %v413
        %v818 = vunpack.c.h.b16 %v413
        %v819 = vunpack.c.l.b16 %v414
        %v820 = vunpack.c.h.b16 %v414
        %v821 = vunpack.c.l.b16 %v415
        %v822 = vunpack.c.h.b16 %v415
        %v823 = vunpack.c.l.b16 %v416
        %v824 = vunpack.c.h.b16 %v416
        %v825 = vunpack.c.l.b16 %v417
        %v826 = vunpack.c.h.b16 %v417
        %v827 = vunpack.c.l.b16 %v418
        %v828 = vunpack.c.h.b16 %v418
        %v829 = vunpack.c.l.b16 %v419
        %v830 = vunpack.c.h.b16 %v419
        %v831 = vunpack.c.l.b16 %v420
        %v832 = vunpack.c.h.b16 %v420
        %v833 = vunpack.c.l.b16 %v421
        %v834 = vunpack.c.h.b16 %v421
        %v835 = vunpack.c.l.b16 %v422
        %v836 = vunpack.c.h.b16 %v422
        %v837 = vunpack.c.l.b16 %v423
        %v838 = vunpack.c.h.b16 %v423
        %v839 = vunpack.c.l.b16 %v424
        %v840 = vunpack.c.h.b16 %v424
        %v841 = vunpack.c.l.b16 %v425
        %v842 = vunpack.c.h.b16 %v425
        %v843 = vunpack.c.l.b16 %v426
        %v844 = vunpack.c.h.b16 %v426
        %v845 = vunpack.c.l.b16 %v427
        %v846 = vunpack.c.h.b16 %v427
        %v847 = vunpack.c.l.b16 %v428
        %v848 = vunpack.c.h.b16 %v428
        %v849 = vunpack.c.l.b16 %v429
        %v850 = vunpack.c.h.b16 %v429
        %v851 = vunpack.c.l.b16 %v430
        %v852 = vunpack.c.h.b16 %v430
        %v853 = vunpack.c.l.b16 %v431
        %v854 = vunpack.c.h.b16 %v431
        %v855 = vunpack.c.l.b16 %v432
        %v856 = vunpack.c.h.b16 %v432
        %v857 = vunpack.c.l.b16 %v433
        %v858 = vunpack.c.h.b16 %v433
        %v859 = vunpack.c.l.b16 %v434
        %v860 = vunpack.c.h.b16 %v434
        %v861 = vunpack.c.l.b16 %v435
        %v862 = vunpack.c.h.b16 %v435
        %v863 = vunpack.c.l.b16 %v436
        %v864 = vunpack.c.h.b16 %v436
        %v865 = vunpack.c.l.b16 %v437
        %v866 = vunpack.c.h.b16 %v437
        %v867 = vunpack.c.l.b16 %v438
        %v868 = vunpack.c.h.b16 %v438
        %v869 = vunpack.c.l.b16 %v439
        %v870 = vunpack.c.h.b16 %v439
        %v871 = vunpack.c.l.b16 %v440
        %v872 = vunpack.c.h.b16 %v440
        %v873 = vunpack.c.l.b16 %v441
        %v874 = vunpack.c.h.b16 %v441
        %v875 = vunpack.c.l.b16 %v442
        %v876 = vunpack.c.h.b16 %v442
        %v877 = vunpack.c.l.b16 %v443
        %v878 = vunpack.c.h.b16 %v443
        %v879 = vunpack.c.l.b16 %v444
        %v880 = vunpack.c.h.b16 %v444
        %v881 = vunpack.c.l.b16 %v445
        %v882 = vunpack.c.h.b16 %v445
        %v883 = vunpack.c.l.b16 %v446
        %v884 = vunpack.c.h.b16 %v446
        %v885 = vunpack.c.l.b16 %v447
        %v886 = vunpack.c.h.b16 %v447
        %v887 = vunpack.c.l.b16 %v448
        %v888 = vunpack.c.h.b16 %v448
        %v889 = vunpack.c.l.b16 %v449
        %v890 = vunpack.c.h.b16 %v449
        %v891 = vunpack.c.l.b16 %v450
        %v892 = vunpack.c.h.b16 %v450
        %v893 = vunpack.c.l.b16 %v451
        %v894 = vunpack.c.h.b16 %v451
        %v895 = vpack.c.b16 %v641, %v639
        %v896 = vpack.c.b16 %v642, %v640
        %v897 = vpack.c.b16 %v645, %v643
        %v898 = vpack.c.b16 %v646, %v644
        %v899 = vpack.c.b16 %v649, %v647
        %v900 = vpack.c.b16 %v650, %v648
        %v901 = vpack.c.b16 %v653, %v651
        %v902 = vpack.c.b16 %v654, %v652
        %v903 = vpack.c.b16 %v657, %v655
        %v904 = vpack.c.b16 %v658, %v656
        %v905 = vpack.c.b16 %v661, %v659
        %v906 = vpack.c.b16 %v662, %v660
        %v907 = vpack.c.b16 %v665, %v663
        %v908 = vpack.c.b16 %v666, %v664
        %v909 = vpack.c.b16 %v669, %v667
        %v910 = vpack.c.b16 %v670, %v668
        %v911 = vpack.c.b16 %v673, %v671
        %v912 = vpack.c.b16 %v674, %v672
        %v913 = vpack.c.b16 %v677, %v675
        %v914 = vpack.c.b16 %v678, %v676
        %v915 = vpack.c.b16 %v681, %v679
        %v916 = vpack.c.b16 %v682, %v680
        %v917 = vpack.c.b16 %v685, %v683
        %v918 = vpack.c.b16 %v686, %v684
        %v919 = vpack.c.b16 %v689, %v687
        %v920 = vpack.c.b16 %v690, %v688
        %v921 = vpack.c.b16 %v693, %v691
        %v922 = vpack.c.b16 %v694, %v692
        %v923 = vpack.c.b16 %v697, %v695
        %v924 = vpack.c.b16 %v698, %v696
        %v925 = vpack.c.b16 %v701, %v699
        %v926 = vpack.c.b16 %v702, %v700
        %v927 = vpack.c.b16 %v705, %v703
        %v928 = vpack.c.b16 %v706, %v704
        %v929 = vpack.c.b16 %v709, %v707
        %v930 = vpack.c.b16 %v710, %v708
        %v931 = vpack.c.b16 %v713, %v711
        %v932 = vpack.c.b16 %v714, %v712
        %v933 = vpack.c.b16 %v717, %v715
        %v934 = vpack.c.b16 %v718, %v716
        %v935 = vpack.c.b16 %v721, %v719
        %v936 = vpack.c.b16 %v722, %v720
        %v937 = vpack.c.b16 %v725, %v723
        %v938 = vpack.c.b16 %v726, %v724
        %v939 = vpack.c.b16 %v729, %v727
        %v940 = vpack.c.b16 %v730, %v728
        %v941 = vpack.c.b16 %v733, %v731
        %v942 = vpack.c.b16 %v734, %v732
        %v943 = vpack.c.b16 %v737, %v735
        %v944 = vpack.c.b16 %v738, %v736
        %v945 = vpack.c.b16 %v741, %v739
        %v946 = vpack.c.b16 %v742, %v740
        %v947 = vpack.c.b16 %v745, %v743
        %v948 = vpack.c.b16 %v746, %v744
        %v949 = vpack.c.b16 %v749, %v747
        %v950 = vpack.c.b16 %v750, %v748
        %v951 = vpack.c.b16 %v753, %v751
        %v952 = vpack.c.b16 %v754, %v752
        %v953 = vpack.c.b16 %v757, %v755
        %v954 = vpack.c.b16 %v758, %v756
        %v955 = vpack.c.b16 %v761, %v759
        %v956 = vpack.c.b16 %v762, %v760
        %v957 = vpack.c.b16 %v765, %v763
        %v958 = vpack.c.b16 %v766, %v764
        %v959 = vpack.c.b16 %v769, %v767
        %v960 = vpack.c.b16 %v770, %v768
        %v961 = vpack.c.b16 %v773, %v771
        %v962 = vpack.c.b16 %v774, %v772
        %v963 = vpack.c.b16 %v777, %v775
        %v964 = vpack.c.b16 %v778, %v776
        %v965 = vpack.c.b16 %v781, %v779
        %v966 = vpack.c.b16 %v782, %v780
        %v967 = vpack.c.b16 %v785, %v783
        %v968 = vpack.c.b16 %v786, %v784
        %v969 = vpack.c.b16 %v789, %v787
        %v970 = vpack.c.b16 %v790, %v788
        %v971 = vpack.c.b16 %v793, %v791
        %v972 = vpack.c.b16 %v794, %v792
        %v973 = vpack.c.b16 %v797, %v795
        %v974 = vpack.c.b16 %v798, %v796
        %v975 = vpack.c.b16 %v801, %v799
        %v976 = vpack.c.b16 %v802, %v800
        %v977 = vpack.c.b16 %v805, %v803
        %v978 = vpack.c.b16 %v806, %v804
        %v979 = vpack.c.b16 %v809, %v807
        %v980 = vpack.c.b16 %v810, %v808
        %v981 = vpack.c.b16 %v813, %v811
        %v982 = vpack.c.b16 %v814, %v812
        %v983 = vpack.c.b16 %v817, %v815
        %v984 = vpack.c.b16 %v818, %v816
        %v985 = vpack.c.b16 %v821, %v819
        %v986 = vpack.c.b16 %v822, %v820
        %v987 = vpack.c.b16 %v825, %v823
        %v988 = vpack.c.b16 %v826, %v824
        %v989 = vpack.c.b16 %v829, %v827
        %v990 = vpack.c.b16 %v830, %v828
        %v991 = vpack.c.b16 %v833, %v831
        %v992 = vpack.c.b16 %v834, %v832
        %v993 = vpack.c.b16 %v837, %v835
        %v994 = vpack.c.b16 %v838, %v836
        %v995 = vpack.c.b16 %v841, %v839
        %v996 = vpack.c.b16 %v842, %v840
        %v997 = vpack.c.b16 %v845, %v843
        %v998 = vpack.c.b16 %v846, %v844
        %v999 = vpack.c.b16 %v849, %v847
        %v1000 = vpack.c.b16 %v850, %v848
        %v1001 = vpack.c.b16 %v853, %v851
        %v1002 = vpack.c.b16 %v854, %v852
        %v1003 = vpack.c.b16 %v857, %v855
        %v1004 = vpack.c.b16 %v858, %v856
        %v1005 = vpack.c.b16 %v861, %v859
        %v1006 = vpack.c.b16 %v862, %v860
        %v1007 = vpack.c.b16 %v865, %v863
        %v1008 = vpack.c.b16 %v866, %v864
        %v1009 = vpack.c.b16 %v869, %v867
        %v1010 = vpack.c.b16 %v870, %v868
        %v1011 = vpack.c.b16 %v873, %v871
        %v1012 = vpack.c.b16 %v874, %v872
        %v1013 = vpack.c.b16 %v877, %v875
        %v1014 = vpack.c.b16 %v878, %v876
        %v1015 = vpack.c.b16 %v881, %v879
        %v1016 = vpack.c.b16 %v882, %v880
        %v1017 = vpack.c.b16 %v885, %v883
        %v1018 = vpack.c.b16 %v886, %v884
        %v1019 = vpack.c.b16 %v889, %v887
        %v1020 = vpack.c.b16 %v890, %v888
        %v1021 = vpack.c.b16 %v893, %v891
        %v1022 = vpack.c.b16 %v894, %v892
        %v1152 = vlaneseq
        %v1153 = vshrl.u32 %v1152, 7
        %v1154 = vsub.s32 0, %v1153
        %v1155 = vrot.slane %v452, %v1154
        %v1156 = vlaneseq
        %v1157 = vshrl.u32 %v1156, 7
        %v1158 = vsub.s32 1, %v1157
        %v1159 = vrot.slane %v452, %v1158
        %1162 = vmatprep.subr.bf16.mxu0 %v896
        %1163 = vmatpush1.bf16.msra.mxu0 %v895
        %1164 = vmatprep.subr.bf16.mxu0 %v898
        %1165 = vmatpush1.bf16.msra.mxu0 %v897
        %1166 = vmatprep.subr.bf16.mxu0 %v900
        %1167 = vmatpush1.bf16.msra.mxu0 %v899
        %1168 = vmatprep.subr.bf16.mxu0 %v902
        %1169 = vmatpush1.bf16.msra.mxu0 %v901
        %1170 = vmatprep.subr.bf16.mxu0 %v904
        %1171 = vmatpush1.bf16.msra.mxu0 %v903
        %1172 = vmatprep.subr.bf16.mxu0 %v906
        %1173 = vmatpush1.bf16.msra.mxu0 %v905
        %1174 = vmatprep.subr.bf16.mxu0 %v908
        %1175 = vmatpush1.bf16.msra.mxu0 %v907
        %1176 = vmatprep.subr.bf16.mxu0 %v910
        %1177 = vmatpush1.bf16.msra.mxu0 %v909
        %1178 = vmatprep.subr.bf16.mxu0 %v912
        %1179 = vmatpush1.bf16.msra.mxu0 %v911
        %1180 = vmatprep.subr.bf16.mxu0 %v914
        %1181 = vmatpush1.bf16.msra.mxu0 %v913
        %1182 = vmatprep.subr.bf16.mxu0 %v916
        %1183 = vmatpush1.bf16.msra.mxu0 %v915
        %1184 = vmatprep.subr.bf16.mxu0 %v918
        %1185 = vmatpush1.bf16.msra.mxu0 %v917
        %1186 = vmatprep.subr.bf16.mxu0 %v920
        %1187 = vmatpush1.bf16.msra.mxu0 %v919
        %1188 = vmatprep.subr.bf16.mxu0 %v922
        %1189 = vmatpush1.bf16.msra.mxu0 %v921
        %1190 = vmatprep.subr.bf16.mxu0 %v924
        %1191 = vmatpush1.bf16.msra.mxu0 %v923
        %1192 = vmatprep.subr.bf16.mxu0 %v926
        %1193 = vmatpush1.bf16.msra.mxu0 %v925
        %1194 = vmatprep.mubr.bf16.mxu0 %v491
        %1195 = vmatmul.mubr.bf16.gmra.mrb[0].mxu0 %v477
        %v1196 = vpop.f32.mrb[0].mxu0
        %v1197 = vadd.f32 %v1155, %v1196
        %v1198 = vpop.f32.mrb[0].mxu0
        %v1199 = vadd.f32 %v1159, %v1198
        %v1200 = vpop.f32.mrb[0].mxu0
        %v1201 = vpop.f32.mrb[0].mxu0
        %1202 = vdwg.mxu0
        %1203 = vmatprep.subr.bf16.mxu0 %v928
        %1204 = vmatpush1.bf16.msra.mxu0 %v927
        %1205 = vmatprep.subr.bf16.mxu0 %v930
        %1206 = vmatpush1.bf16.msra.mxu0 %v929
        %1207 = vmatprep.subr.bf16.mxu0 %v932
        %1208 = vmatpush1.bf16.msra.mxu0 %v931
        %1209 = vmatprep.subr.bf16.mxu0 %v934
        %1210 = vmatpush1.bf16.msra.mxu0 %v933
        %1211 = vmatprep.subr.bf16.mxu0 %v936
        %1212 = vmatpush1.bf16.msra.mxu0 %v935
        %1213 = vmatprep.subr.bf16.mxu0 %v938
        %1214 = vmatpush1.bf16.msra.mxu0 %v937
        %1215 = vmatprep.subr.bf16.mxu0 %v940
        %1216 = vmatpush1.bf16.msra.mxu0 %v939
        %1217 = vmatprep.subr.bf16.mxu0 %v942
        %1218 = vmatpush1.bf16.msra.mxu0 %v941
        %1219 = vmatprep.subr.bf16.mxu0 %v944
        %1220 = vmatpush1.bf16.msra.mxu0 %v943
        %1221 = vmatprep.subr.bf16.mxu0 %v946
        %1222 = vmatpush1.bf16.msra.mxu0 %v945
        %1223 = vmatprep.subr.bf16.mxu0 %v948
        %1224 = vmatpush1.bf16.msra.mxu0 %v947
        %1225 = vmatprep.subr.bf16.mxu0 %v950
        %1226 = vmatpush1.bf16.msra.mxu0 %v949
        %1227 = vmatprep.subr.bf16.mxu0 %v952
        %1228 = vmatpush1.bf16.msra.mxu0 %v951
        %1229 = vmatprep.subr.bf16.mxu0 %v954
        %1230 = vmatpush1.bf16.msra.mxu0 %v953
        %1231 = vmatprep.subr.bf16.mxu0 %v956
        %1232 = vmatpush1.bf16.msra.mxu0 %v955
        %1233 = vmatprep.subr.bf16.mxu0 %v958
        %1234 = vmatpush1.bf16.msra.mxu0 %v957
        %1235 = vmatprep.mubr.bf16.mxu0 %v501
        %1236 = vmatmul.mubr.bf16.gmra.mrb[0].mxu0 %v499
        %v1237 = vpop.f32.mrb[0].mxu0
        %v1238 = vadd.f32 %v1197, %v1237
        %v1239 = vpop.f32.mrb[0].mxu0
        %v1240 = vadd.f32 %v1199, %v1239
        %v1241 = vpop.f32.mrb[0].mxu0
        %v1242 = vpop.f32.mrb[0].mxu0
        %1243 = vdwg.mxu0
        %1244 = vmatprep.subr.bf16.mxu0 %v960
        %1245 = vmatpush1.bf16.msra.mxu0 %v959
        %1246 = vmatprep.subr.bf16.mxu0 %v962
        %1247 = vmatpush1.bf16.msra.mxu0 %v961
        %1248 = vmatprep.subr.bf16.mxu0 %v964
        %1249 = vmatpush1.bf16.msra.mxu0 %v963
        %1250 = vmatprep.subr.bf16.mxu0 %v966
        %1251 = vmatpush1.bf16.msra.mxu0 %v965
        %1252 = vmatprep.subr.bf16.mxu0 %v968
        %1253 = vmatpush1.bf16.msra.mxu0 %v967
        %1254 = vmatprep.subr.bf16.mxu0 %v970
        %1255 = vmatpush1.bf16.msra.mxu0 %v969
        %1256 = vmatprep.subr.bf16.mxu0 %v972
        %1257 = vmatpush1.bf16.msra.mxu0 %v971
        %1258 = vmatprep.subr.bf16.mxu0 %v974
        %1259 = vmatpush1.bf16.msra.mxu0 %v973
        %1260 = vmatprep.subr.bf16.mxu0 %v976
        %1261 = vmatpush1.bf16.msra.mxu0 %v975
        %1262 = vmatprep.subr.bf16.mxu0 %v978
        %1263 = vmatpush1.bf16.msra.mxu0 %v977
        %1264 = vmatprep.subr.bf16.mxu0 %v980
        %1265 = vmatpush1.bf16.msra.mxu0 %v979
        %1266 = vmatprep.subr.bf16.mxu0 %v982
        %1267 = vmatpush1.bf16.msra.mxu0 %v981
        %1268 = vmatprep.subr.bf16.mxu0 %v984
        %1269 = vmatpush1.bf16.msra.mxu0 %v983
        %1270 = vmatprep.subr.bf16.mxu0 %v986
        %1271 = vmatpush1.bf16.msra.mxu0 %v985
        %1272 = vmatprep.subr.bf16.mxu0 %v988
        %1273 = vmatpush1.bf16.msra.mxu0 %v987
        %1274 = vmatprep.subr.bf16.mxu0 %v990
        %1275 = vmatpush1.bf16.msra.mxu0 %v989
        %1276 = vmatprep.mubr.bf16.mxu0 %v498
        %1277 = vmatmul.mubr.bf16.gmra.mrb[0].mxu0 %v484
        %v1278 = vpop.f32.mrb[0].mxu0
        %v1279 = vadd.f32 %v1238, %v1278
        %v1280 = vpop.f32.mrb[0].mxu0
        %v1281 = vadd.f32 %v1240, %v1280
        %v1282 = vpop.f32.mrb[0].mxu0
        %v1283 = vpop.f32.mrb[0].mxu0
        %1284 = vdwg.mxu0
        %1285 = vmatprep.subr.bf16.mxu0 %v992
        %1286 = vmatpush1.bf16.msra.mxu0 %v991
        %1287 = vmatprep.subr.bf16.mxu0 %v994
        %1288 = vmatpush1.bf16.msra.mxu0 %v993
        %1289 = vmatprep.subr.bf16.mxu0 %v996
        %1290 = vmatpush1.bf16.msra.mxu0 %v995
        %1291 = vmatprep.subr.bf16.mxu0 %v998
        %1292 = vmatpush1.bf16.msra.mxu0 %v997
        %1293 = vmatprep.subr.bf16.mxu0 %v1000
        %1294 = vmatpush1.bf16.msra.mxu0 %v999
        %1295 = vmatprep.subr.bf16.mxu0 %v1002
        %1296 = vmatpush1.bf16.msra.mxu0 %v1001
        %1297 = vmatprep.subr.bf16.mxu0 %v1004
        %1298 = vmatpush1.bf16.msra.mxu0 %v1003
        %1299 = vmatprep.subr.bf16.mxu0 %v1006
        %1300 = vmatpush1.bf16.msra.mxu0 %v1005
        %1301 = vmatprep.subr.bf16.mxu0 %v1008
        %1302 = vmatpush1.bf16.msra.mxu0 %v1007
        %1303 = vmatprep.subr.bf16.mxu0 %v1010
        %1304 = vmatpush1.bf16.msra.mxu0 %v1009
        %1305 = vmatprep.subr.bf16.mxu0 %v1012
        %1306 = vmatpush1.bf16.msra.mxu0 %v1011
        %1307 = vmatprep.subr.bf16.mxu0 %v1014
        %1308 = vmatpush1.bf16.msra.mxu0 %v1013
        %1309 = vmatprep.subr.bf16.mxu0 %v1016
        %1310 = vmatpush1.bf16.msra.mxu0 %v1015
        %1311 = vmatprep.subr.bf16.mxu0 %v1018
        %1312 = vmatpush1.bf16.msra.mxu0 %v1017
        %1313 = vmatprep.subr.bf16.mxu0 %v1020
        %1314 = vmatpush1.bf16.msra.mxu0 %v1019
        %1315 = vmatprep.subr.bf16.mxu0 %v1022
        %1316 = vmatpush1.bf16.msra.mxu0 %v1021
        %1317 = vmatprep.mubr.bf16.mxu0 %v502
        %1318 = vmatmul.mubr.bf16.gmra.mrb[0].mxu0 %v500
        %v1319 = vpop.f32.mrb[0].mxu0
        %v1320 = vadd.f32 %v1279, %v1319
        %v1321 = vpop.f32.mrb[0].mxu0
        %v1322 = vadd.f32 %v1281, %v1321
        %v1323 = vpop.f32.mrb[0].mxu0
        %v1324 = vpop.f32.mrb[0].mxu0
        %1325 = vdwg.mxu0
        %v1326 = vmax.f32 %v1320, 0.0
        %v1327 = vmax.f32 %v1322, 0.0
        %s1328 = smul.u32 %s26, 256
        %v1329 = vpack.c.bf16 %v1326, %v1326
        %v1330 = vpack.c.bf16 %v1327, %v1327
        %v1333 = vcombine.low %v1329, %v1330
        %v1335 = vunpack.c.l.s4 1966171168
        %v1336 = vunpack.c.0.s8 %v1335
        %v1337 = vlaneseq
        %v1338 = vshrl.u32 %v1337, 7
        %v1339 = vsub.s32 %v1336, %v1338
        %v1340 = vrot.slane %v1333, %v1339
        %v1342 = vunpack.c.l.s4 1966171168
        %v1343 = vunpack.c.0.s8 %v1342
        %v1344 = vlaneseq
        %v1345 = vshrl.u32 %v1344, 7
        %v1346 = vsub.s32 %v1343, %v1345
        %v1347 = vrot.slane %v1340, %v1346
        %s1349 = sshra.s32 %s1328, 7
        %s1350 = sand.u32 %s1328, 127
        %s1351 = scalar_lea.vmem [#allocation2], %s1349
        %vm1352 = vcmask 1040384
        %vm1353 = vsmask.f32 256
        %vm1354 = vmand %vm1352, %vm1353
        %vm1355 = vcmask 1041409
        %vm1356 = vsmask.f32 1280
        %vm1357 = vmand %vm1355, %vm1356
        %vm1358 = vmor %vm1357, %vm1354
        %v1359 = vld [vmem:[%s1351] sm:$0x3]
        %v1360 = vsel %vm1358, %v1347, %v1359
        %1361 = vst [vmem:[%s1351] sm:$0x3] %v1360
        %p1362 = scmp.eq.s32.totalorder %s26, 1
        // Predicated region
        $region57: #{simple_restriction_forward.1} parent=39 // pred_check
          %p1363 = pneg %p1362
        $region58: #{simple_restriction_forward.1} parent=39 // pred_check_branch
          %1365 = sbr.rel (%p1363) target = $region60
        $region59: #{simple_restriction_forward.1} parent=39 // pred_region
          %v1366 = vld [vmem:[#allocation2] sm:$0xf]
          %v1367 = vld [vmem:[#allocation8] sm:$0xff]
          %v1368 = vld [vmem:[#allocation8 + $0x8] sm:$0xff]
          %v1369 = vld [vmem:[#allocation8 + $0x28] sm:$0xff]
          %v1370 = vld [vmem:[#allocation8 + $0x30] sm:$0xff]
          %v1371 = vld [vmem:[#allocation8 + $0x50] sm:$0xff]
          %v1372 = vld [vmem:[#allocation8 + $0x58] sm:$0xff]
          %v1373 = vld [vmem:[#allocation8 + $0x78] sm:$0xff]
          %v1374 = vld [vmem:[#allocation8 + $0x80] sm:$0xff]
          %v1375 = vld [vmem:[#allocation8 + $0xa0] sm:$0xff]
          %v1376 = vld [vmem:[#allocation8 + $0xa8] sm:$0xff]
          %v1377 = vld [vmem:[#allocation8 + $0xc8] sm:$0xff]
          %v1378 = vld [vmem:[#allocation8 + $0xd0] sm:$0xff]
          %v1379 = vld [vmem:[#allocation8 + $0xf0] sm:$0xff]
          %v1380 = vld [vmem:[#allocation8 + $0xf8] sm:$0xff]
          %v1381 = vld [vmem:[#allocation8 + $0x118] sm:$0xff]
          %v1382 = vld [vmem:[#allocation8 + $0x120] sm:$0xff]
          %v1383 = vld [vmem:[#allocation8 + $0x140] sm:$0xff]
          %v1384 = vld [vmem:[#allocation8 + $0x148] sm:$0xff]
          %v1385 = vld [vmem:[#allocation8 + $0x168] sm:$0xff]
          %v1386 = vld [vmem:[#allocation8 + $0x170] sm:$0xff]
          %v1387 = vld [vmem:[#allocation8 + $0x190] sm:$0xff]
          %v1388 = vld [vmem:[#allocation8 + $0x198] sm:$0xff]
          %v1389 = vld [vmem:[#allocation8 + $0x1b8] sm:$0xff]
          %v1390 = vld [vmem:[#allocation8 + $0x1c0] sm:$0xff]
          %v1391 = vld [vmem:[#allocation8 + $0x1e0] sm:$0xff]
          %v1392 = vld [vmem:[#allocation8 + $0x1e8] sm:$0xff]
          %v1393 = vld [vmem:[#allocation8 + $0x208] sm:$0xff]
          %v1394 = vld [vmem:[#allocation8 + $0x210] sm:$0xff]
          %v1395 = vld [vmem:[#allocation8 + $0x230] sm:$0xff]
          %v1396 = vld [vmem:[#allocation8 + $0x238] sm:$0xff]
          %v1397 = vld [vmem:[#allocation8 + $0x258] sm:$0xff]
          %v1398 = vld [vmem:[#allocation8 + $0x260] sm:$0xff]
          %v1399 = vld [vmem:[#allocation8 + $0x280] sm:$0xff]
          %v1400 = vld [vmem:[#allocation8 + $0x288] sm:$0xff]
          %v1401 = vld [vmem:[#allocation8 + $0x2a8] sm:$0xff]
          %v1402 = vld [vmem:[#allocation8 + $0x2b0] sm:$0xff]
          %v1403 = vld [vmem:[#allocation8 + $0x2d0] sm:$0xff]
          %v1404 = vld [vmem:[#allocation8 + $0x2d8] sm:$0xff]
          %v1405 = vld [vmem:[#allocation8 + $0x2f8] sm:$0xff]
          %v1406 = vld [vmem:[#allocation8 + $0x300] sm:$0xff]
          %v1407 = vld [vmem:[#allocation8 + $0x320] sm:$0xff]
          %v1408 = vld [vmem:[#allocation8 + $0x328] sm:$0xff]
          %v1409 = vld [vmem:[#allocation8 + $0x348] sm:$0xff]
          %v1410 = vld [vmem:[#allocation8 + $0x350] sm:$0xff]
          %v1411 = vld [vmem:[#allocation8 + $0x370] sm:$0xff]
          %v1412 = vld [vmem:[#allocation8 + $0x378] sm:$0xff]
          %v1413 = vld [vmem:[#allocation8 + $0x398] sm:$0xff]
          %v1414 = vld [vmem:[#allocation8 + $0x3a0] sm:$0xff]
          %v1415 = vld [vmem:[#allocation8 + $0x3c0] sm:$0xff]
          %v1416 = vld [vmem:[#allocation8 + $0x3c8] sm:$0xff]
          %v1417 = vld [vmem:[#allocation8 + $0x3e8] sm:$0xff]
          %v1418 = vld [vmem:[#allocation8 + $0x3f0] sm:$0xff]
          %v1419 = vld [vmem:[#allocation8 + $0x410] sm:$0xff]
          %v1420 = vld [vmem:[#allocation8 + $0x418] sm:$0xff]
          %v1421 = vld [vmem:[#allocation8 + $0x438] sm:$0xff]
          %v1422 = vld [vmem:[#allocation8 + $0x440] sm:$0xff]
          %v1423 = vld [vmem:[#allocation8 + $0x460] sm:$0xff]
          %v1424 = vld [vmem:[#allocation8 + $0x468] sm:$0xff]
          %v1425 = vld [vmem:[#allocation8 + $0x488] sm:$0xff]
          %v1426 = vld [vmem:[#allocation8 + $0x490] sm:$0xff]
          %v1427 = vld [vmem:[#allocation8 + $0x4b0] sm:$0xff]
          %v1428 = vld [vmem:[#allocation8 + $0x4b8] sm:$0xff]
          %v1429 = vld [vmem:[#allocation8 + $0x4d8] sm:$0xff]
          %v1430 = vld [vmem:[#allocation8 + $0x4e0] sm:$0xff]
          %v1431 = vld [vmem:[#allocation8 + $0x500] sm:$0xff]
          %v1432 = vld [vmem:[#allocation8 + $0x508] sm:$0xff]
          %v1433 = vld [vmem:[#allocation8 + $0x528] sm:$0xff]
          %v1434 = vld [vmem:[#allocation8 + $0x530] sm:$0xff]
          %v1435 = vld [vmem:[#allocation8 + $0x550] sm:$0xff]
          %v1436 = vld [vmem:[#allocation8 + $0x558] sm:$0xff]
          %v1437 = vld [vmem:[#allocation8 + $0x578] sm:$0xff]
          %v1438 = vld [vmem:[#allocation8 + $0x580] sm:$0xff]
          %v1439 = vld [vmem:[#allocation8 + $0x5a0] sm:$0xff]
          %v1440 = vld [vmem:[#allocation8 + $0x5a8] sm:$0xff]
          %v1441 = vld [vmem:[#allocation8 + $0x5c8] sm:$0xff]
          %v1442 = vld [vmem:[#allocation8 + $0x5d0] sm:$0xff]
          %v1443 = vld [vmem:[#allocation8 + $0x5f0] sm:$0xff]
          %v1444 = vld [vmem:[#allocation8 + $0x5f8] sm:$0xff]
          %v1445 = vld [vmem:[#allocation8 + $0x618] sm:$0xff]
          %v1446 = vld [vmem:[#allocation8 + $0x620] sm:$0xff]
          %v1447 = vld [vmem:[#allocation8 + $0x640] sm:$0xff]
          %v1448 = vld [vmem:[#allocation8 + $0x648] sm:$0xff]
          %v1449 = vld [vmem:[#allocation8 + $0x668] sm:$0xff]
          %v1450 = vld [vmem:[#allocation8 + $0x670] sm:$0xff]
          %v1451 = vld [vmem:[#allocation8 + $0x690] sm:$0xff]
          %v1452 = vld [vmem:[#allocation8 + $0x698] sm:$0xff]
          %v1453 = vld [vmem:[#allocation8 + $0x6b8] sm:$0xff]
          %v1454 = vld [vmem:[#allocation8 + $0x6c0] sm:$0xff]
          %v1455 = vld [vmem:[#allocation8 + $0x6e0] sm:$0xff]
          %v1456 = vld [vmem:[#allocation8 + $0x6e8] sm:$0xff]
          %v1457 = vld [vmem:[#allocation8 + $0x708] sm:$0xff]
          %v1458 = vld [vmem:[#allocation8 + $0x710] sm:$0xff]
          %v1459 = vld [vmem:[#allocation8 + $0x730] sm:$0xff]
          %v1460 = vld [vmem:[#allocation8 + $0x738] sm:$0xff]
          %v1461 = vld [vmem:[#allocation8 + $0x758] sm:$0xff]
          %v1462 = vld [vmem:[#allocation8 + $0x760] sm:$0xff]
          %v1463 = vld [vmem:[#allocation8 + $0x780] sm:$0xff]
          %v1464 = vld [vmem:[#allocation8 + $0x788] sm:$0xff]
          %v1465 = vld [vmem:[#allocation8 + $0x7a8] sm:$0xff]
          %v1466 = vld [vmem:[#allocation8 + $0x7b0] sm:$0xff]
          %v1467 = vld [vmem:[#allocation8 + $0x7d0] sm:$0xff]
          %v1468 = vld [vmem:[#allocation8 + $0x7d8] sm:$0xff]
          %v1469 = vld [vmem:[#allocation8 + $0x7f8] sm:$0xff]
          %v1470 = vld [vmem:[#allocation8 + $0x800] sm:$0xff]
          %v1471 = vld [vmem:[#allocation8 + $0x820] sm:$0xff]
          %v1472 = vld [vmem:[#allocation8 + $0x828] sm:$0xff]
          %v1473 = vld [vmem:[#allocation8 + $0x848] sm:$0xff]
          %v1474 = vld [vmem:[#allocation8 + $0x850] sm:$0xff]
          %v1475 = vld [vmem:[#allocation8 + $0x870] sm:$0xff]
          %v1476 = vld [vmem:[#allocation8 + $0x878] sm:$0xff]
          %v1477 = vld [vmem:[#allocation8 + $0x898] sm:$0xff]
          %v1478 = vld [vmem:[#allocation8 + $0x8a0] sm:$0xff]
          %v1479 = vld [vmem:[#allocation8 + $0x8c0] sm:$0xff]
          %v1480 = vld [vmem:[#allocation8 + $0x8c8] sm:$0xff]
          %v1481 = vld [vmem:[#allocation8 + $0x8e8] sm:$0xff]
          %v1482 = vld [vmem:[#allocation8 + $0x8f0] sm:$0xff]
          %v1483 = vld [vmem:[#allocation8 + $0x910] sm:$0xff]
          %v1484 = vld [vmem:[#allocation8 + $0x918] sm:$0xff]
          %v1485 = vld [vmem:[#allocation8 + $0x938] sm:$0xff]
          %v1486 = vld [vmem:[#allocation8 + $0x940] sm:$0xff]
          %v1487 = vld [vmem:[#allocation8 + $0x960] sm:$0xff]
          %v1488 = vld [vmem:[#allocation8 + $0x968] sm:$0xff]
          %v1489 = vld [vmem:[#allocation8 + $0x988] sm:$0xff]
          %v1490 = vld [vmem:[#allocation8 + $0x990] sm:$0xff]
          %v1491 = vld [vmem:[#allocation8 + $0x9b0] sm:$0xff]
          %v1492 = vld [vmem:[#allocation8 + $0x9b8] sm:$0xff]
          %v1493 = vld [vmem:[#allocation8 + $0x9d8] sm:$0xff]
          %v1494 = vld [vmem:[#allocation8 + $0x9e0] sm:$0xff]
          %v1495 = vld [vmem:[#allocation9] sm:$0xf]
          %v1498 = vunpack.c.l.s4 1966171168
          %v1499 = vunpack.c.0.s8 %v1498
          %v1500 = vlaneseq
          %v1501 = vshrl.u32 %v1500, 7
          %v1502 = vsub.s32 %v1499, %v1501
          %v1503 = vrot.slane %v1366, %v1502
          %v1504 = vcombine.high %v1503, %v1503
          %v1506 = vunpack.c.l.s4 1966171168
          %v1507 = vunpack.c.0.s8 %v1506
          %v1508 = vlaneseq
          %v1509 = vshrl.u32 %v1508, 7
          %v1510 = vsub.s32 %v1507, %v1509
          %v1511 = vrot.slane %v1503, %v1510
          %v1513 = vunpack.c.l.s4 1966171168
          %v1514 = vunpack.c.0.s8 %v1513
          %v1515 = vlaneseq
          %v1516 = vshrl.u32 %v1515, 7
          %v1517 = vsub.s32 %v1514, %v1516
          %v1518 = vrot.slane %v1504, %v1517
          %v1519 = vcombine.high %v1511, %v1511
          %v1520 = vcombine.high %v1518, %v1518
          %v1653 = vunpack.c.l.b16 %v1367
          %v1654 = vunpack.c.h.b16 %v1367
          %v1655 = vunpack.c.l.b16 %v1368
          %v1656 = vunpack.c.h.b16 %v1368
          %v1657 = vunpack.c.l.b16 %v1369
          %v1658 = vunpack.c.h.b16 %v1369
          %v1659 = vunpack.c.l.b16 %v1370
          %v1660 = vunpack.c.h.b16 %v1370
          %v1661 = vunpack.c.l.b16 %v1371
          %v1662 = vunpack.c.h.b16 %v1371
          %v1663 = vunpack.c.l.b16 %v1372
          %v1664 = vunpack.c.h.b16 %v1372
          %v1665 = vunpack.c.l.b16 %v1373
          %v1666 = vunpack.c.h.b16 %v1373
          %v1667 = vunpack.c.l.b16 %v1374
          %v1668 = vunpack.c.h.b16 %v1374
          %v1669 = vunpack.c.l.b16 %v1375
          %v1670 = vunpack.c.h.b16 %v1375
          %v1671 = vunpack.c.l.b16 %v1376
          %v1672 = vunpack.c.h.b16 %v1376
          %v1673 = vunpack.c.l.b16 %v1377
          %v1674 = vunpack.c.h.b16 %v1377
          %v1675 = vunpack.c.l.b16 %v1378
          %v1676 = vunpack.c.h.b16 %v1378
          %v1677 = vunpack.c.l.b16 %v1379
          %v1678 = vunpack.c.h.b16 %v1379
          %v1679 = vunpack.c.l.b16 %v1380
          %v1680 = vunpack.c.h.b16 %v1380
          %v1681 = vunpack.c.l.b16 %v1381
          %v1682 = vunpack.c.h.b16 %v1381
          %v1683 = vunpack.c.l.b16 %v1382
          %v1684 = vunpack.c.h.b16 %v1382
          %v1685 = vunpack.c.l.b16 %v1383
          %v1686 = vunpack.c.h.b16 %v1383
          %v1687 = vunpack.c.l.b16 %v1384
          %v1688 = vunpack.c.h.b16 %v1384
          %v1689 = vunpack.c.l.b16 %v1385
          %v1690 = vunpack.c.h.b16 %v1385
          %v1691 = vunpack.c.l.b16 %v1386
          %v1692 = vunpack.c.h.b16 %v1386
          %v1693 = vunpack.c.l.b16 %v1387
          %v1694 = vunpack.c.h.b16 %v1387
          %v1695 = vunpack.c.l.b16 %v1388
          %v1696 = vunpack.c.h.b16 %v1388
          %v1697 = vunpack.c.l.b16 %v1389
          %v1698 = vunpack.c.h.b16 %v1389
          %v1699 = vunpack.c.l.b16 %v1390
          %v1700 = vunpack.c.h.b16 %v1390
          %v1701 = vunpack.c.l.b16 %v1391
          %v1702 = vunpack.c.h.b16 %v1391
          %v1703 = vunpack.c.l.b16 %v1392
          %v1704 = vunpack.c.h.b16 %v1392
          %v1705 = vunpack.c.l.b16 %v1393
          %v1706 = vunpack.c.h.b16 %v1393
          %v1707 = vunpack.c.l.b16 %v1394
          %v1708 = vunpack.c.h.b16 %v1394
          %v1709 = vunpack.c.l.b16 %v1395
          %v1710 = vunpack.c.h.b16 %v1395
          %v1711 = vunpack.c.l.b16 %v1396
          %v1712 = vunpack.c.h.b16 %v1396
          %v1713 = vunpack.c.l.b16 %v1397
          %v1714 = vunpack.c.h.b16 %v1397
          %v1715 = vunpack.c.l.b16 %v1398
          %v1716 = vunpack.c.h.b16 %v1398
          %v1717 = vunpack.c.l.b16 %v1399
          %v1718 = vunpack.c.h.b16 %v1399
          %v1719 = vunpack.c.l.b16 %v1400
          %v1720 = vunpack.c.h.b16 %v1400
          %v1721 = vunpack.c.l.b16 %v1401
          %v1722 = vunpack.c.h.b16 %v1401
          %v1723 = vunpack.c.l.b16 %v1402
          %v1724 = vunpack.c.h.b16 %v1402
          %v1725 = vunpack.c.l.b16 %v1403
          %v1726 = vunpack.c.h.b16 %v1403
          %v1727 = vunpack.c.l.b16 %v1404
          %v1728 = vunpack.c.h.b16 %v1404
          %v1729 = vunpack.c.l.b16 %v1405
          %v1730 = vunpack.c.h.b16 %v1405
          %v1731 = vunpack.c.l.b16 %v1406
          %v1732 = vunpack.c.h.b16 %v1406
          %v1733 = vunpack.c.l.b16 %v1407
          %v1734 = vunpack.c.h.b16 %v1407
          %v1735 = vunpack.c.l.b16 %v1408
          %v1736 = vunpack.c.h.b16 %v1408
          %v1737 = vunpack.c.l.b16 %v1409
          %v1738 = vunpack.c.h.b16 %v1409
          %v1739 = vunpack.c.l.b16 %v1410
          %v1740 = vunpack.c.h.b16 %v1410
          %v1741 = vunpack.c.l.b16 %v1411
          %v1742 = vunpack.c.h.b16 %v1411
          %v1743 = vunpack.c.l.b16 %v1412
          %v1744 = vunpack.c.h.b16 %v1412
          %v1745 = vunpack.c.l.b16 %v1413
          %v1746 = vunpack.c.h.b16 %v1413
          %v1747 = vunpack.c.l.b16 %v1414
          %v1748 = vunpack.c.h.b16 %v1414
          %v1749 = vunpack.c.l.b16 %v1415
          %v1750 = vunpack.c.h.b16 %v1415
          %v1751 = vunpack.c.l.b16 %v1416
          %v1752 = vunpack.c.h.b16 %v1416
          %v1753 = vunpack.c.l.b16 %v1417
          %v1754 = vunpack.c.h.b16 %v1417
          %v1755 = vunpack.c.l.b16 %v1418
          %v1756 = vunpack.c.h.b16 %v1418
          %v1757 = vunpack.c.l.b16 %v1419
          %v1758 = vunpack.c.h.b16 %v1419
          %v1759 = vunpack.c.l.b16 %v1420
          %v1760 = vunpack.c.h.b16 %v1420
          %v1761 = vunpack.c.l.b16 %v1421
          %v1762 = vunpack.c.h.b16 %v1421
          %v1763 = vunpack.c.l.b16 %v1422
          %v1764 = vunpack.c.h.b16 %v1422
          %v1765 = vunpack.c.l.b16 %v1423
          %v1766 = vunpack.c.h.b16 %v1423
          %v1767 = vunpack.c.l.b16 %v1424
          %v1768 = vunpack.c.h.b16 %v1424
          %v1769 = vunpack.c.l.b16 %v1425
          %v1770 = vunpack.c.h.b16 %v1425
          %v1771 = vunpack.c.l.b16 %v1426
          %v1772 = vunpack.c.h.b16 %v1426
          %v1773 = vunpack.c.l.b16 %v1427
          %v1774 = vunpack.c.h.b16 %v1427
          %v1775 = vunpack.c.l.b16 %v1428
          %v1776 = vunpack.c.h.b16 %v1428
          %v1777 = vunpack.c.l.b16 %v1429
          %v1778 = vunpack.c.h.b16 %v1429
          %v1779 = vunpack.c.l.b16 %v1430
          %v1780 = vunpack.c.h.b16 %v1430
          %v1781 = vunpack.c.l.b16 %v1431
          %v1782 = vunpack.c.h.b16 %v1431
          %v1783 = vunpack.c.l.b16 %v1432
          %v1784 = vunpack.c.h.b16 %v1432
          %v1785 = vunpack.c.l.b16 %v1433
          %v1786 = vunpack.c.h.b16 %v1433
          %v1787 = vunpack.c.l.b16 %v1434
          %v1788 = vunpack.c.h.b16 %v1434
          %v1789 = vunpack.c.l.b16 %v1435
          %v1790 = vunpack.c.h.b16 %v1435
          %v1791 = vunpack.c.l.b16 %v1436
          %v1792 = vunpack.c.h.b16 %v1436
          %v1793 = vunpack.c.l.b16 %v1437
          %v1794 = vunpack.c.h.b16 %v1437
          %v1795 = vunpack.c.l.b16 %v1438
          %v1796 = vunpack.c.h.b16 %v1438
          %v1797 = vunpack.c.l.b16 %v1439
          %v1798 = vunpack.c.h.b16 %v1439
          %v1799 = vunpack.c.l.b16 %v1440
          %v1800 = vunpack.c.h.b16 %v1440
          %v1801 = vunpack.c.l.b16 %v1441
          %v1802 = vunpack.c.h.b16 %v1441
          %v1803 = vunpack.c.l.b16 %v1442
          %v1804 = vunpack.c.h.b16 %v1442
          %v1805 = vunpack.c.l.b16 %v1443
          %v1806 = vunpack.c.h.b16 %v1443
          %v1807 = vunpack.c.l.b16 %v1444
          %v1808 = vunpack.c.h.b16 %v1444
          %v1809 = vunpack.c.l.b16 %v1445
          %v1810 = vunpack.c.h.b16 %v1445
          %v1811 = vunpack.c.l.b16 %v1446
          %v1812 = vunpack.c.h.b16 %v1446
          %v1813 = vunpack.c.l.b16 %v1447
          %v1814 = vunpack.c.h.b16 %v1447
          %v1815 = vunpack.c.l.b16 %v1448
          %v1816 = vunpack.c.h.b16 %v1448
          %v1817 = vunpack.c.l.b16 %v1449
          %v1818 = vunpack.c.h.b16 %v1449
          %v1819 = vunpack.c.l.b16 %v1450
          %v1820 = vunpack.c.h.b16 %v1450
          %v1821 = vunpack.c.l.b16 %v1451
          %v1822 = vunpack.c.h.b16 %v1451
          %v1823 = vunpack.c.l.b16 %v1452
          %v1824 = vunpack.c.h.b16 %v1452
          %v1825 = vunpack.c.l.b16 %v1453
          %v1826 = vunpack.c.h.b16 %v1453
          %v1827 = vunpack.c.l.b16 %v1454
          %v1828 = vunpack.c.h.b16 %v1454
          %v1829 = vunpack.c.l.b16 %v1455
          %v1830 = vunpack.c.h.b16 %v1455
          %v1831 = vunpack.c.l.b16 %v1456
          %v1832 = vunpack.c.h.b16 %v1456
          %v1833 = vunpack.c.l.b16 %v1457
          %v1834 = vunpack.c.h.b16 %v1457
          %v1835 = vunpack.c.l.b16 %v1458
          %v1836 = vunpack.c.h.b16 %v1458
          %v1837 = vunpack.c.l.b16 %v1459
          %v1838 = vunpack.c.h.b16 %v1459
          %v1839 = vunpack.c.l.b16 %v1460
          %v1840 = vunpack.c.h.b16 %v1460
          %v1841 = vunpack.c.l.b16 %v1461
          %v1842 = vunpack.c.h.b16 %v1461
          %v1843 = vunpack.c.l.b16 %v1462
          %v1844 = vunpack.c.h.b16 %v1462
          %v1845 = vunpack.c.l.b16 %v1463
          %v1846 = vunpack.c.h.b16 %v1463
          %v1847 = vunpack.c.l.b16 %v1464
          %v1848 = vunpack.c.h.b16 %v1464
          %v1849 = vunpack.c.l.b16 %v1465
          %v1850 = vunpack.c.h.b16 %v1465
          %v1851 = vunpack.c.l.b16 %v1466
          %v1852 = vunpack.c.h.b16 %v1466
          %v1853 = vunpack.c.l.b16 %v1467
          %v1854 = vunpack.c.h.b16 %v1467
          %v1855 = vunpack.c.l.b16 %v1468
          %v1856 = vunpack.c.h.b16 %v1468
          %v1857 = vunpack.c.l.b16 %v1469
          %v1858 = vunpack.c.h.b16 %v1469
          %v1859 = vunpack.c.l.b16 %v1470
          %v1860 = vunpack.c.h.b16 %v1470
          %v1861 = vunpack.c.l.b16 %v1471
          %v1862 = vunpack.c.h.b16 %v1471
          %v1863 = vunpack.c.l.b16 %v1472
          %v1864 = vunpack.c.h.b16 %v1472
          %v1865 = vunpack.c.l.b16 %v1473
          %v1866 = vunpack.c.h.b16 %v1473
          %v1867 = vunpack.c.l.b16 %v1474
          %v1868 = vunpack.c.h.b16 %v1474
          %v1869 = vunpack.c.l.b16 %v1475
          %v1870 = vunpack.c.h.b16 %v1475
          %v1871 = vunpack.c.l.b16 %v1476
          %v1872 = vunpack.c.h.b16 %v1476
          %v1873 = vunpack.c.l.b16 %v1477
          %v1874 = vunpack.c.h.b16 %v1477
          %v1875 = vunpack.c.l.b16 %v1478
          %v1876 = vunpack.c.h.b16 %v1478
          %v1877 = vunpack.c.l.b16 %v1479
          %v1878 = vunpack.c.h.b16 %v1479
          %v1879 = vunpack.c.l.b16 %v1480
          %v1880 = vunpack.c.h.b16 %v1480
          %v1881 = vunpack.c.l.b16 %v1481
          %v1882 = vunpack.c.h.b16 %v1481
          %v1883 = vunpack.c.l.b16 %v1482
          %v1884 = vunpack.c.h.b16 %v1482
          %v1885 = vunpack.c.l.b16 %v1483
          %v1886 = vunpack.c.h.b16 %v1483
          %v1887 = vunpack.c.l.b16 %v1484
          %v1888 = vunpack.c.h.b16 %v1484
          %v1889 = vunpack.c.l.b16 %v1485
          %v1890 = vunpack.c.h.b16 %v1485
          %v1891 = vunpack.c.l.b16 %v1486
          %v1892 = vunpack.c.h.b16 %v1486
          %v1893 = vunpack.c.l.b16 %v1487
          %v1894 = vunpack.c.h.b16 %v1487
          %v1895 = vunpack.c.l.b16 %v1488
          %v1896 = vunpack.c.h.b16 %v1488
          %v1897 = vunpack.c.l.b16 %v1489
          %v1898 = vunpack.c.h.b16 %v1489
          %v1899 = vunpack.c.l.b16 %v1490
          %v1900 = vunpack.c.h.b16 %v1490
          %v1901 = vunpack.c.l.b16 %v1491
          %v1902 = vunpack.c.h.b16 %v1491
          %v1903 = vunpack.c.l.b16 %v1492
          %v1904 = vunpack.c.h.b16 %v1492
          %v1905 = vunpack.c.l.b16 %v1493
          %v1906 = vunpack.c.h.b16 %v1493
          %v1907 = vunpack.c.l.b16 %v1494
          %v1908 = vunpack.c.h.b16 %v1494
          %v1909 = vpack.c.b16 %v1657, %v1653
          %v1910 = vpack.c.b16 %v1658, %v1654
          %v1911 = vpack.c.b16 %v1659, %v1655
          %v1912 = vpack.c.b16 %v1660, %v1656
          %v1913 = vpack.c.b16 %v1665, %v1661
          %v1914 = vpack.c.b16 %v1666, %v1662
          %v1915 = vpack.c.b16 %v1667, %v1663
          %v1916 = vpack.c.b16 %v1668, %v1664
          %v1917 = vpack.c.b16 %v1673, %v1669
          %v1918 = vpack.c.b16 %v1674, %v1670
          %v1919 = vpack.c.b16 %v1675, %v1671
          %v1920 = vpack.c.b16 %v1676, %v1672
          %v1921 = vpack.c.b16 %v1681, %v1677
          %v1922 = vpack.c.b16 %v1682, %v1678
          %v1923 = vpack.c.b16 %v1683, %v1679
          %v1924 = vpack.c.b16 %v1684, %v1680
          %v1925 = vpack.c.b16 %v1689, %v1685
          %v1926 = vpack.c.b16 %v1690, %v1686
          %v1927 = vpack.c.b16 %v1691, %v1687
          %v1928 = vpack.c.b16 %v1692, %v1688
          %v1929 = vpack.c.b16 %v1697, %v1693
          %v1930 = vpack.c.b16 %v1698, %v1694
          %v1931 = vpack.c.b16 %v1699, %v1695
          %v1932 = vpack.c.b16 %v1700, %v1696
          %v1933 = vpack.c.b16 %v1705, %v1701
          %v1934 = vpack.c.b16 %v1706, %v1702
          %v1935 = vpack.c.b16 %v1707, %v1703
          %v1936 = vpack.c.b16 %v1708, %v1704
          %v1937 = vpack.c.b16 %v1713, %v1709
          %v1938 = vpack.c.b16 %v1714, %v1710
          %v1939 = vpack.c.b16 %v1715, %v1711
          %v1940 = vpack.c.b16 %v1716, %v1712
          %v1941 = vpack.c.b16 %v1721, %v1717
          %v1942 = vpack.c.b16 %v1722, %v1718
          %v1943 = vpack.c.b16 %v1723, %v1719
          %v1944 = vpack.c.b16 %v1724, %v1720
          %v1945 = vpack.c.b16 %v1729, %v1725
          %v1946 = vpack.c.b16 %v1730, %v1726
          %v1947 = vpack.c.b16 %v1731, %v1727
          %v1948 = vpack.c.b16 %v1732, %v1728
          %v1949 = vpack.c.b16 %v1737, %v1733
          %v1950 = vpack.c.b16 %v1738, %v1734
          %v1951 = vpack.c.b16 %v1739, %v1735
          %v1952 = vpack.c.b16 %v1740, %v1736
          %v1953 = vpack.c.b16 %v1745, %v1741
          %v1954 = vpack.c.b16 %v1746, %v1742
          %v1955 = vpack.c.b16 %v1747, %v1743
          %v1956 = vpack.c.b16 %v1748, %v1744
          %v1957 = vpack.c.b16 %v1753, %v1749
          %v1958 = vpack.c.b16 %v1754, %v1750
          %v1959 = vpack.c.b16 %v1755, %v1751
          %v1960 = vpack.c.b16 %v1756, %v1752
          %v1961 = vpack.c.b16 %v1761, %v1757
          %v1962 = vpack.c.b16 %v1762, %v1758
          %v1963 = vpack.c.b16 %v1763, %v1759
          %v1964 = vpack.c.b16 %v1764, %v1760
          %v1965 = vpack.c.b16 %v1769, %v1765
          %v1966 = vpack.c.b16 %v1770, %v1766
          %v1967 = vpack.c.b16 %v1771, %v1767
          %v1968 = vpack.c.b16 %v1772, %v1768
          %v1969 = vpack.c.b16 %v1777, %v1773
          %v1970 = vpack.c.b16 %v1778, %v1774
          %v1971 = vpack.c.b16 %v1779, %v1775
          %v1972 = vpack.c.b16 %v1780, %v1776
          %v1973 = vpack.c.b16 %v1785, %v1781
          %v1974 = vpack.c.b16 %v1786, %v1782
          %v1975 = vpack.c.b16 %v1787, %v1783
          %v1976 = vpack.c.b16 %v1788, %v1784
          %v1977 = vpack.c.b16 %v1793, %v1789
          %v1978 = vpack.c.b16 %v1794, %v1790
          %v1979 = vpack.c.b16 %v1795, %v1791
          %v1980 = vpack.c.b16 %v1796, %v1792
          %v1981 = vpack.c.b16 %v1801, %v1797
          %v1982 = vpack.c.b16 %v1802, %v1798
          %v1983 = vpack.c.b16 %v1803, %v1799
          %v1984 = vpack.c.b16 %v1804, %v1800
          %v1985 = vpack.c.b16 %v1809, %v1805
          %v1986 = vpack.c.b16 %v1810, %v1806
          %v1987 = vpack.c.b16 %v1811, %v1807
          %v1988 = vpack.c.b16 %v1812, %v1808
          %v1989 = vpack.c.b16 %v1817, %v1813
          %v1990 = vpack.c.b16 %v1818, %v1814
          %v1991 = vpack.c.b16 %v1819, %v1815
          %v1992 = vpack.c.b16 %v1820, %v1816
          %v1993 = vpack.c.b16 %v1825, %v1821
          %v1994 = vpack.c.b16 %v1826, %v1822
          %v1995 = vpack.c.b16 %v1827, %v1823
          %v1996 = vpack.c.b16 %v1828, %v1824
          %v1997 = vpack.c.b16 %v1833, %v1829
          %v1998 = vpack.c.b16 %v1834, %v1830
          %v1999 = vpack.c.b16 %v1835, %v1831
          %v2000 = vpack.c.b16 %v1836, %v1832
          %v2001 = vpack.c.b16 %v1841, %v1837
          %v2002 = vpack.c.b16 %v1842, %v1838
          %v2003 = vpack.c.b16 %v1843, %v1839
          %v2004 = vpack.c.b16 %v1844, %v1840
          %v2005 = vpack.c.b16 %v1849, %v1845
          %v2006 = vpack.c.b16 %v1850, %v1846
          %v2007 = vpack.c.b16 %v1851, %v1847
          %v2008 = vpack.c.b16 %v1852, %v1848
          %v2009 = vpack.c.b16 %v1857, %v1853
          %v2010 = vpack.c.b16 %v1858, %v1854
          %v2011 = vpack.c.b16 %v1859, %v1855
          %v2012 = vpack.c.b16 %v1860, %v1856
          %v2013 = vpack.c.b16 %v1865, %v1861
          %v2014 = vpack.c.b16 %v1866, %v1862
          %v2015 = vpack.c.b16 %v1867, %v1863
          %v2016 = vpack.c.b16 %v1868, %v1864
          %v2017 = vpack.c.b16 %v1873, %v1869
          %v2018 = vpack.c.b16 %v1874, %v1870
          %v2019 = vpack.c.b16 %v1875, %v1871
          %v2020 = vpack.c.b16 %v1876, %v1872
          %v2021 = vpack.c.b16 %v1881, %v1877
          %v2022 = vpack.c.b16 %v1882, %v1878
          %v2023 = vpack.c.b16 %v1883, %v1879
          %v2024 = vpack.c.b16 %v1884, %v1880
          %v2025 = vpack.c.b16 %v1889, %v1885
          %v2026 = vpack.c.b16 %v1890, %v1886
          %v2027 = vpack.c.b16 %v1891, %v1887
          %v2028 = vpack.c.b16 %v1892, %v1888
          %v2029 = vpack.c.b16 %v1897, %v1893
          %v2030 = vpack.c.b16 %v1898, %v1894
          %v2031 = vpack.c.b16 %v1899, %v1895
          %v2032 = vpack.c.b16 %v1900, %v1896
          %v2033 = vpack.c.b16 %v1905, %v1901
          %v2034 = vpack.c.b16 %v1906, %v1902
          %v2035 = vpack.c.b16 %v1907, %v1903
          %v2036 = vpack.c.b16 %v1908, %v1904
          %v2166 = vlaneseq
          %v2167 = vshrl.u32 %v2166, 7
          %v2168 = vsub.s32 0, %v2167
          %v2169 = vrot.slane %v1495, %v2168
          %v2170 = vlaneseq
          %v2171 = vshrl.u32 %v2170, 7
          %v2172 = vsub.s32 1, %v2171
          %v2173 = vrot.slane %v1495, %v2172
          %v2174 = vlaneseq
          %v2175 = vshrl.u32 %v2174, 7
          %v2176 = vsub.s32 2, %v2175
          %v2177 = vrot.slane %v1495, %v2176
          %v2178 = vlaneseq
          %v2179 = vshrl.u32 %v2178, 7
          %v2180 = vsub.s32 3, %v2179
          %v2181 = vrot.slane %v1495, %v2180
          %2186 = vmatprep.subr.bf16.mxu0 %v1910
          %2187 = vmatpush1.bf16.msra.mxu0 %v1909
          %2188 = vmatprep.subr.bf16.mxu0 %v1914
          %2189 = vmatpush1.bf16.msra.mxu0 %v1913
          %2190 = vmatprep.subr.bf16.mxu0 %v1918
          %2191 = vmatpush1.bf16.msra.mxu0 %v1917
          %2192 = vmatprep.subr.bf16.mxu0 %v1922
          %2193 = vmatpush1.bf16.msra.mxu0 %v1921
          %2194 = vmatprep.subr.bf16.mxu0 %v1926
          %2195 = vmatpush1.bf16.msra.mxu0 %v1925
          %2196 = vmatprep.subr.bf16.mxu0 %v1930
          %2197 = vmatpush1.bf16.msra.mxu0 %v1929
          %2198 = vmatprep.subr.bf16.mxu0 %v1934
          %2199 = vmatpush1.bf16.msra.mxu0 %v1933
          %2200 = vmatprep.subr.bf16.mxu0 %v1938
          %2201 = vmatpush1.bf16.msra.mxu0 %v1937
          %2202 = vmatprep.subr.bf16.mxu0 %v1942
          %2203 = vmatpush1.bf16.msra.mxu0 %v1941
          %2204 = vmatprep.subr.bf16.mxu0 %v1946
          %2205 = vmatpush1.bf16.msra.mxu0 %v1945
          %2206 = vmatprep.subr.bf16.mxu0 %v1950
          %2207 = vmatpush1.bf16.msra.mxu0 %v1949
          %2208 = vmatprep.subr.bf16.mxu0 %v1954
          %2209 = vmatpush1.bf16.msra.mxu0 %v1953
          %2210 = vmatprep.subr.bf16.mxu0 %v1958
          %2211 = vmatpush1.bf16.msra.mxu0 %v1957
          %2212 = vmatprep.subr.bf16.mxu0 %v1962
          %2213 = vmatpush1.bf16.msra.mxu0 %v1961
          %2214 = vmatprep.subr.bf16.mxu0 %v1966
          %2215 = vmatpush1.bf16.msra.mxu0 %v1965
          %2216 = vmatprep.subr.bf16.mxu0 %v1970
          %2217 = vmatpush1.bf16.msra.mxu0 %v1969
          %2218 = vmatprep.mubr.bf16.mxu0 %v1518
          %2219 = vmatmul.mubr.bf16.gmra.mrb[0].mxu0 %v1511
          %v2220 = vpop.f32.mrb[0].mxu0
          %v2221 = vadd.f32 %v2169, %v2220
          %v2222 = vpop.f32.mrb[0].mxu0
          %v2223 = vadd.f32 %v2173, %v2222
          %v2224 = vpop.f32.mrb[0].mxu0
          %v2225 = vpop.f32.mrb[0].mxu0
          %2226 = vdwg.mxu0
          %2227 = vmatprep.subr.bf16.mxu0 %v1974
          %2228 = vmatpush1.bf16.msra.mxu0 %v1973
          %2229 = vmatprep.subr.bf16.mxu0 %v1978
          %2230 = vmatpush1.bf16.msra.mxu0 %v1977
          %2231 = vmatprep.subr.bf16.mxu0 %v1982
          %2232 = vmatpush1.bf16.msra.mxu0 %v1981
          %2233 = vmatprep.subr.bf16.mxu0 %v1986
          %2234 = vmatpush1.bf16.msra.mxu0 %v1985
          %2235 = vmatprep.subr.bf16.mxu0 %v1990
          %2236 = vmatpush1.bf16.msra.mxu0 %v1989
          %2237 = vmatprep.subr.bf16.mxu0 %v1994
          %2238 = vmatpush1.bf16.msra.mxu0 %v1993
          %2239 = vmatprep.subr.bf16.mxu0 %v1998
          %2240 = vmatpush1.bf16.msra.mxu0 %v1997
          %2241 = vmatprep.subr.bf16.mxu0 %v2002
          %2242 = vmatpush1.bf16.msra.mxu0 %v2001
          %2243 = vmatprep.subr.bf16.mxu0 %v2006
          %2244 = vmatpush1.bf16.msra.mxu0 %v2005
          %2245 = vmatprep.subr.bf16.mxu0 %v2010
          %2246 = vmatpush1.bf16.msra.mxu0 %v2009
          %2247 = vmatprep.subr.bf16.mxu0 %v2014
          %2248 = vmatpush1.bf16.msra.mxu0 %v2013
          %2249 = vmatprep.subr.bf16.mxu0 %v2018
          %2250 = vmatpush1.bf16.msra.mxu0 %v2017
          %2251 = vmatprep.subr.bf16.mxu0 %v2022
          %2252 = vmatpush1.bf16.msra.mxu0 %v2021
          %2253 = vmatprep.subr.bf16.mxu0 %v2026
          %2254 = vmatpush1.bf16.msra.mxu0 %v2025
          %2255 = vmatprep.subr.bf16.mxu0 %v2030
          %2256 = vmatpush1.bf16.msra.mxu0 %v2029
          %2257 = vmatprep.subr.bf16.mxu0 %v2034
          %2258 = vmatpush1.bf16.msra.mxu0 %v2033
          %2259 = vmatprep.mubr.bf16.mxu0 %v1520
          %2260 = vmatmul.mubr.bf16.gmra.mrb[0].mxu0 %v1519
          %v2261 = vpop.f32.mrb[0].mxu0
          %v2262 = vadd.f32 %v2221, %v2261
          %v2263 = vpop.f32.mrb[0].mxu0
          %v2264 = vadd.f32 %v2223, %v2263
          %v2265 = vpop.f32.mrb[0].mxu0
          %v2266 = vpop.f32.mrb[0].mxu0
          %2267 = vdwg.mxu0
          %2268 = vmatprep.subr.bf16.mxu0 %v1912
          %2269 = vmatpush1.bf16.msra.mxu0 %v1911
          %2270 = vmatprep.subr.bf16.mxu0 %v1916
          %2271 = vmatpush1.bf16.msra.mxu0 %v1915
          %2272 = vmatprep.subr.bf16.mxu0 %v1920
          %2273 = vmatpush1.bf16.msra.mxu0 %v1919
          %2274 = vmatprep.subr.bf16.mxu0 %v1924
          %2275 = vmatpush1.bf16.msra.mxu0 %v1923
          %2276 = vmatprep.subr.bf16.mxu0 %v1928
          %2277 = vmatpush1.bf16.msra.mxu0 %v1927
          %2278 = vmatprep.subr.bf16.mxu0 %v1932
          %2279 = vmatpush1.bf16.msra.mxu0 %v1931
          %2280 = vmatprep.subr.bf16.mxu0 %v1936
          %2281 = vmatpush1.bf16.msra.mxu0 %v1935
          %2282 = vmatprep.subr.bf16.mxu0 %v1940
          %2283 = vmatpush1.bf16.msra.mxu0 %v1939
          %2284 = vmatprep.subr.bf16.mxu0 %v1944
          %2285 = vmatpush1.bf16.msra.mxu0 %v1943
          %2286 = vmatprep.subr.bf16.mxu0 %v1948
          %2287 = vmatpush1.bf16.msra.mxu0 %v1947
          %2288 = vmatprep.subr.bf16.mxu0 %v1952
          %2289 = vmatpush1.bf16.msra.mxu0 %v1951
          %2290 = vmatprep.subr.bf16.mxu0 %v1956
          %2291 = vmatpush1.bf16.msra.mxu0 %v1955
          %2292 = vmatprep.subr.bf16.mxu0 %v1960
          %2293 = vmatpush1.bf16.msra.mxu0 %v1959
          %2294 = vmatprep.subr.bf16.mxu0 %v1964
          %2295 = vmatpush1.bf16.msra.mxu0 %v1963
          %2296 = vmatprep.subr.bf16.mxu0 %v1968
          %2297 = vmatpush1.bf16.msra.mxu0 %v1967
          %2298 = vmatprep.subr.bf16.mxu0 %v1972
          %2299 = vmatpush1.bf16.msra.mxu0 %v1971
          %2300 = vmatprep.mubr.bf16.mxu0 %v1518
          %2301 = vmatmul.mubr.bf16.gmra.mrb[0].mxu0 %v1511
          %v2302 = vpop.f32.mrb[0].mxu0
          %v2303 = vadd.f32 %v2177, %v2302
          %v2304 = vpop.f32.mrb[0].mxu0
          %v2305 = vadd.f32 %v2181, %v2304
          %v2306 = vpop.f32.mrb[0].mxu0
          %v2307 = vpop.f32.mrb[0].mxu0
          %2308 = vdwg.mxu0
          %2309 = vmatprep.subr.bf16.mxu0 %v1976
          %2310 = vmatpush1.bf16.msra.mxu0 %v1975
          %2311 = vmatprep.subr.bf16.mxu0 %v1980
          %2312 = vmatpush1.bf16.msra.mxu0 %v1979
          %2313 = vmatprep.subr.bf16.mxu0 %v1984
          %2314 = vmatpush1.bf16.msra.mxu0 %v1983
          %2315 = vmatprep.subr.bf16.mxu0 %v1988
          %2316 = vmatpush1.bf16.msra.mxu0 %v1987
          %2317 = vmatprep.subr.bf16.mxu0 %v1992
          %2318 = vmatpush1.bf16.msra.mxu0 %v1991
          %2319 = vmatprep.subr.bf16.mxu0 %v1996
          %2320 = vmatpush1.bf16.msra.mxu0 %v1995
          %2321 = vmatprep.subr.bf16.mxu0 %v2000
          %2322 = vmatpush1.bf16.msra.mxu0 %v1999
          %2323 = vmatprep.subr.bf16.mxu0 %v2004
          %2324 = vmatpush1.bf16.msra.mxu0 %v2003
          %2325 = vmatprep.subr.bf16.mxu0 %v2008
          %2326 = vmatpush1.bf16.msra.mxu0 %v2007
          %2327 = vmatprep.subr.bf16.mxu0 %v2012
          %2328 = vmatpush1.bf16.msra.mxu0 %v2011
          %2329 = vmatprep.subr.bf16.mxu0 %v2016
          %2330 = vmatpush1.bf16.msra.mxu0 %v2015
          %2331 = vmatprep.subr.bf16.mxu0 %v2020
          %2332 = vmatpush1.bf16.msra.mxu0 %v2019
          %2333 = vmatprep.subr.bf16.mxu0 %v2024
          %2334 = vmatpush1.bf16.msra.mxu0 %v2023
          %2335 = vmatprep.subr.bf16.mxu0 %v2028
          %2336 = vmatpush1.bf16.msra.mxu0 %v2027
          %2337 = vmatprep.subr.bf16.mxu0 %v2032
          %2338 = vmatpush1.bf16.msra.mxu0 %v2031
          %2339 = vmatprep.subr.bf16.mxu0 %v2036
          %2340 = vmatpush1.bf16.msra.mxu0 %v2035
          %2341 = vmatprep.mubr.bf16.mxu0 %v1520
          %2342 = vmatmul.mubr.bf16.gmra.mrb[0].mxu0 %v1519
          %v2343 = vpop.f32.mrb[0].mxu0
          %v2344 = vadd.f32 %v2303, %v2343
          %v2345 = vpop.f32.mrb[0].mxu0
          %v2346 = vadd.f32 %v2305, %v2345
          %v2347 = vpop.f32.mrb[0].mxu0
          %v2348 = vpop.f32.mrb[0].mxu0
          %2349 = vdwg.mxu0
          %v2350 = vmax.f32 %v2262, 0.0
          %v2351 = vmax.f32 %v2264, 0.0
          %v2352 = vmax.f32 %v2344, 0.0
          %v2353 = vmax.f32 %v2346, 0.0
          %v2358 = vcombine.low %v2350, %v2351
          %v2359 = vcombine.low %v2352, %v2353
          %v2361 = vunpack.c.l.s4 1966171168
          %v2362 = vunpack.c.0.s8 %v2361
          %v2363 = vlaneseq
          %v2364 = vshrl.u32 %v2363, 7
          %v2365 = vsub.s32 %v2362, %v2364
          %v2366 = vrot.slane %v2358, %v2365
          %v2368 = vunpack.c.l.s4 1966171168
          %v2369 = vunpack.c.0.s8 %v2368
          %v2370 = vlaneseq
          %v2371 = vshrl.u32 %v2370, 7
          %v2372 = vsub.s32 %v2369, %v2371
          %v2373 = vrot.slane %v2359, %v2372
          %v2374 = vcombine.low %v2366, %v2373
          %v2376 = vunpack.c.l.s4 1966171168
          %v2377 = vunpack.c.0.s8 %v2376
          %v2378 = vlaneseq
          %v2379 = vshrl.u32 %v2378, 7
          %v2380 = vsub.s32 %v2377, %v2379
          %v2381 = vrot.slane %v2374, %v2380
          %v2383 = vlaneseq
          %vm2384 = vcmp.ge.s32.totalorder %v2383, 0
          %vm2385 = vcmp.lt.s32.totalorder %v2383, 512
          %vm2386 = vmand %vm2384, %vm2385
          %2387 = vst.msk [vmem:[#allocation11] sm:$0xf] %vm2386, %v2381
          %v2388 = vpack.c.bf16 %v2350, %v2350
          %v2389 = vpack.c.bf16 %v2351, %v2351
          %v2390 = vld [vmem:[#allocation8 + $0x10] sm:$0xff]
          %v2391 = vld [vmem:[#allocation8 + $0x38] sm:$0xff]
          %v2392 = vld [vmem:[#allocation8 + $0x60] sm:$0xff]
          %v2393 = vld [vmem:[#allocation8 + $0x88] sm:$0xff]
          %v2394 = vld [vmem:[#allocation8 + $0xb0] sm:$0xff]
          %v2395 = vld [vmem:[#allocation8 + $0xd8] sm:$0xff]
          %v2396 = vld [vmem:[#allocation8 + $0x100] sm:$0xff]
          %v2397 = vld [vmem:[#allocation8 + $0x128] sm:$0xff]
          %v2398 = vld [vmem:[#allocation8 + $0x150] sm:$0xff]
          %v2399 = vld [vmem:[#allocation8 + $0x178] sm:$0xff]
          %v2400 = vld [vmem:[#allocation8 + $0x1a0] sm:$0xff]
          %v2401 = vld [vmem:[#allocation8 + $0x1c8] sm:$0xff]
          %v2402 = vld [vmem:[#allocation8 + $0x1f0] sm:$0xff]
          %v2403 = vld [vmem:[#allocation8 + $0x218] sm:$0xff]
          %v2404 = vld [vmem:[#allocation8 + $0x240] sm:$0xff]
          %v2405 = vld [vmem:[#allocation8 + $0x268] sm:$0xff]
          %v2406 = vld [vmem:[#allocation8 + $0x290] sm:$0xff]
          %v2407 = vld [vmem:[#allocation8 + $0x2b8] sm:$0xff]
          %v2408 = vld [vmem:[#allocation8 + $0x2e0] sm:$0xff]
          %v2409 = vld [vmem:[#allocation8 + $0x308] sm:$0xff]
          %v2410 = vld [vmem:[#allocation8 + $0x330] sm:$0xff]
          %v2411 = vld [vmem:[#allocation8 + $0x358] sm:$0xff]
          %v2412 = vld [vmem:[#allocation8 + $0x380] sm:$0xff]
          %v2413 = vld [vmem:[#allocation8 + $0x3a8] sm:$0xff]
          %v2414 = vld [vmem:[#allocation8 + $0x3d0] sm:$0xff]
          %v2415 = vld [vmem:[#allocation8 + $0x3f8] sm:$0xff]
          %v2416 = vld [vmem:[#allocation8 + $0x420] sm:$0xff]
          %v2417 = vld [vmem:[#allocation8 + $0x448] sm:$0xff]
          %v2418 = vld [vmem:[#allocation8 + $0x470] sm:$0xff]
          %v2419 = vld [vmem:[#allocation8 + $0x498] sm:$0xff]
          %v2420 = vld [vmem:[#allocation8 + $0x4c0] sm:$0xff]
          %v2421 = vld [vmem:[#allocation8 + $0x4e8] sm:$0xff]
          %v2422 = vld [vmem:[#allocation9 + $0x4] sm:$0x3]
          %v2455 = vunpack.c.l.b16 %v2390
          %v2456 = vunpack.c.h.b16 %v2390
          %v2457 = vunpack.c.l.b16 %v2391
          %v2458 = vunpack.c.h.b16 %v2391
          %v2459 = vunpack.c.l.b16 %v2392
          %v2460 = vunpack.c.h.b16 %v2392
          %v2461 = vunpack.c.l.b16 %v2393
          %v2462 = vunpack.c.h.b16 %v2393
          %v2463 = vunpack.c.l.b16 %v2394
          %v2464 = vunpack.c.h.b16 %v2394
          %v2465 = vunpack.c.l.b16 %v2395
          %v2466 = vunpack.c.h.b16 %v2395
          %v2467 = vunpack.c.l.b16 %v2396
          %v2468 = vunpack.c.h.b16 %v2396
          %v2469 = vunpack.c.l.b16 %v2397
          %v2470 = vunpack.c.h.b16 %v2397
          %v2471 = vunpack.c.l.b16 %v2398
          %v2472 = vunpack.c.h.b16 %v2398
          %v2473 = vunpack.c.l.b16 %v2399
          %v2474 = vunpack.c.h.b16 %v2399
          %v2475 = vunpack.c.l.b16 %v2400
          %v2476 = vunpack.c.h.b16 %v2400
          %v2477 = vunpack.c.l.b16 %v2401
          %v2478 = vunpack.c.h.b16 %v2401
          %v2479 = vunpack.c.l.b16 %v2402
          %v2480 = vunpack.c.h.b16 %v2402
          %v2481 = vunpack.c.l.b16 %v2403
          %v2482 = vunpack.c.h.b16 %v2403
          %v2483 = vunpack.c.l.b16 %v2404
          %v2484 = vunpack.c.h.b16 %v2404
          %v2485 = vunpack.c.l.b16 %v2405
          %v2486 = vunpack.c.h.b16 %v2405
          %v2487 = vunpack.c.l.b16 %v2406
          %v2488 = vunpack.c.h.b16 %v2406
          %v2489 = vunpack.c.l.b16 %v2407
          %v2490 = vunpack.c.h.b16 %v2407
          %v2491 = vunpack.c.l.b16 %v2408
          %v2492 = vunpack.c.h.b16 %v2408
          %v2493 = vunpack.c.l.b16 %v2409
          %v2494 = vunpack.c.h.b16 %v2409
          %v2495 = vunpack.c.l.b16 %v2410
          %v2496 = vunpack.c.h.b16 %v2410
          %v2497 = vunpack.c.l.b16 %v2411
          %v2498 = vunpack.c.h.b16 %v2411
          %v2499 = vunpack.c.l.b16 %v2412
          %v2500 = vunpack.c.h.b16 %v2412
          %v2501 = vunpack.c.l.b16 %v2413
          %v2502 = vunpack.c.h.b16 %v2413
          %v2503 = vunpack.c.l.b16 %v2414
          %v2504 = vunpack.c.h.b16 %v2414
          %v2505 = vunpack.c.l.b16 %v2415
          %v2506 = vunpack.c.h.b16 %v2415
          %v2507 = vunpack.c.l.b16 %v2416
          %v2508 = vunpack.c.h.b16 %v2416
          %v2509 = vunpack.c.l.b16 %v2417
          %v2510 = vunpack.c.h.b16 %v2417
          %v2511 = vunpack.c.l.b16 %v2418
          %v2512 = vunpack.c.h.b16 %v2418
          %v2513 = vunpack.c.l.b16 %v2419
          %v2514 = vunpack.c.h.b16 %v2419
          %v2515 = vunpack.c.l.b16 %v2420
          %v2516 = vunpack.c.h.b16 %v2420
          %v2517 = vunpack.c.l.b16 %v2421
          %v2518 = vunpack.c.h.b16 %v2421
          %v2519 = vpack.c.b16 %v2457, %v2455
          %v2520 = vpack.c.b16 %v2458, %v2456
          %v2521 = vpack.c.b16 %v2461, %v2459
          %v2522 = vpack.c.b16 %v2462, %v2460
          %v2523 = vpack.c.b16 %v2465, %v2463
          %v2524 = vpack.c.b16 %v2466, %v2464
          %v2525 = vpack.c.b16 %v2469, %v2467
          %v2526 = vpack.c.b16 %v2470, %v2468
          %v2527 = vpack.c.b16 %v2473, %v2471
          %v2528 = vpack.c.b16 %v2474, %v2472
          %v2529 = vpack.c.b16 %v2477, %v2475
          %v2530 = vpack.c.b16 %v2478, %v2476
          %v2531 = vpack.c.b16 %v2481, %v2479
          %v2532 = vpack.c.b16 %v2482, %v2480
          %v2533 = vpack.c.b16 %v2485, %v2483
          %v2534 = vpack.c.b16 %v2486, %v2484
          %v2535 = vpack.c.b16 %v2489, %v2487
          %v2536 = vpack.c.b16 %v2490, %v2488
          %v2537 = vpack.c.b16 %v2493, %v2491
          %v2538 = vpack.c.b16 %v2494, %v2492
          %v2539 = vpack.c.b16 %v2497, %v2495
          %v2540 = vpack.c.b16 %v2498, %v2496
          %v2541 = vpack.c.b16 %v2501, %v2499
          %v2542 = vpack.c.b16 %v2502, %v2500
          %v2543 = vpack.c.b16 %v2505, %v2503
          %v2544 = vpack.c.b16 %v2506, %v2504
          %v2545 = vpack.c.b16 %v2509, %v2507
          %v2546 = vpack.c.b16 %v2510, %v2508
          %v2547 = vpack.c.b16 %v2513, %v2511
          %v2548 = vpack.c.b16 %v2514, %v2512
          %v2549 = vpack.c.b16 %v2517, %v2515
          %v2550 = vpack.c.b16 %v2518, %v2516
          %v2584 = vlaneseq
          %v2585 = vshrl.u32 %v2584, 7
          %v2586 = vsub.s32 0, %v2585
          %v2587 = vrot.slane %v2422, %v2586
          %v2588 = vlaneseq
          %v2589 = vshrl.u32 %v2588, 7
          %v2590 = vsub.s32 1, %v2589
          %v2591 = vrot.slane %v2422, %v2590
          %2594 = vmatprep.subr.bf16.mxu0 %v2520
          %2595 = vmatpush1.bf16.msra.mxu0 %v2519
          %2596 = vmatprep.subr.bf16.mxu0 %v2522
          %2597 = vmatpush1.bf16.msra.mxu0 %v2521
          %2598 = vmatprep.subr.bf16.mxu0 %v2524
          %2599 = vmatpush1.bf16.msra.mxu0 %v2523
          %2600 = vmatprep.subr.bf16.mxu0 %v2526
          %2601 = vmatpush1.bf16.msra.mxu0 %v2525
          %2602 = vmatprep.subr.bf16.mxu0 %v2528
          %2603 = vmatpush1.bf16.msra.mxu0 %v2527
          %2604 = vmatprep.subr.bf16.mxu0 %v2530
          %2605 = vmatpush1.bf16.msra.mxu0 %v2529
          %2606 = vmatprep.subr.bf16.mxu0 %v2532
          %2607 = vmatpush1.bf16.msra.mxu0 %v2531
          %2608 = vmatprep.subr.bf16.mxu0 %v2534
          %2609 = vmatpush1.bf16.msra.mxu0 %v2533
          %2610 = vmatprep.subr.bf16.mxu0 %v2536
          %2611 = vmatpush1.bf16.msra.mxu0 %v2535
          %2612 = vmatprep.subr.bf16.mxu0 %v2538
          %2613 = vmatpush1.bf16.msra.mxu0 %v2537
          %2614 = vmatprep.subr.bf16.mxu0 %v2540
          %2615 = vmatpush1.bf16.msra.mxu0 %v2539
          %2616 = vmatprep.subr.bf16.mxu0 %v2542
          %2617 = vmatpush1.bf16.msra.mxu0 %v2541
          %2618 = vmatprep.subr.bf16.mxu0 %v2544
          %2619 = vmatpush1.bf16.msra.mxu0 %v2543
          %2620 = vmatprep.subr.bf16.mxu0 %v2546
          %2621 = vmatpush1.bf16.msra.mxu0 %v2545
          %2622 = vmatprep.subr.bf16.mxu0 %v2548
          %2623 = vmatpush1.bf16.msra.mxu0 %v2547
          %2624 = vmatprep.subr.bf16.mxu0 %v2550
          %2625 = vmatpush1.bf16.msra.mxu0 %v2549
          %2626 = vmatprep.mubr.bf16.mxu0 %v2389
          %2627 = vmatmul.mubr.bf16.gmra.mrb[0].mxu0 %v2388
          %v2628 = vpop.f32.mrb[0].mxu0
          %v2629 = vadd.f32 %v2587, %v2628
          %v2630 = vpop.f32.mrb[0].mxu0
          %v2631 = vadd.f32 %v2591, %v2630
          %v2632 = vpop.f32.mrb[0].mxu0
          %v2633 = vpop.f32.mrb[0].mxu0
          %2634 = vdwg.mxu0
          %v2635 = vmax.f32 %v2629, 0.0
          %v2636 = vmax.f32 %v2631, 0.0
          %v2637 = vpack.c.bf16 %v2635, %v2635
          %v2638 = vpack.c.bf16 %v2636, %v2636
          %v2639 = vld [vmem:[#allocation8 + $0x18] sm:$0xff]
          %v2640 = vld [vmem:[#allocation8 + $0x20] sm:$0xff]
          %v2641 = vld [vmem:[#allocation8 + $0x40] sm:$0xff]
          %v2642 = vld [vmem:[#allocation8 + $0x48] sm:$0xff]
          %v2643 = vld [vmem:[#allocation8 + $0x68] sm:$0xff]
          %v2644 = vld [vmem:[#allocation8 + $0x70] sm:$0xff]
          %v2645 = vld [vmem:[#allocation8 + $0x90] sm:$0xff]
          %v2646 = vld [vmem:[#allocation8 + $0x98] sm:$0xff]
          %v2647 = vld [vmem:[#allocation8 + $0xb8] sm:$0xff]
          %v2648 = vld [vmem:[#allocation8 + $0xc0] sm:$0xff]
          %v2649 = vld [vmem:[#allocation8 + $0xe0] sm:$0xff]
          %v2650 = vld [vmem:[#allocation8 + $0xe8] sm:$0xff]
          %v2651 = vld [vmem:[#allocation8 + $0x108] sm:$0xff]
          %v2652 = vld [vmem:[#allocation8 + $0x110] sm:$0xff]
          %v2653 = vld [vmem:[#allocation8 + $0x130] sm:$0xff]
          %v2654 = vld [vmem:[#allocation8 + $0x138] sm:$0xff]
          %v2655 = vld [vmem:[#allocation8 + $0x158] sm:$0xff]
          %v2656 = vld [vmem:[#allocation8 + $0x160] sm:$0xff]
          %v2657 = vld [vmem:[#allocation8 + $0x180] sm:$0xff]
          %v2658 = vld [vmem:[#allocation8 + $0x188] sm:$0xff]
          %v2659 = vld [vmem:[#allocation8 + $0x1a8] sm:$0xff]
          %v2660 = vld [vmem:[#allocation8 + $0x1b0] sm:$0xff]
          %v2661 = vld [vmem:[#allocation8 + $0x1d0] sm:$0xff]
          %v2662 = vld [vmem:[#allocation8 + $0x1d8] sm:$0xff]
          %v2663 = vld [vmem:[#allocation8 + $0x1f8] sm:$0xff]
          %v2664 = vld [vmem:[#allocation8 + $0x200] sm:$0xff]
          %v2665 = vld [vmem:[#allocation8 + $0x220] sm:$0xff]
          %v2666 = vld [vmem:[#allocation8 + $0x228] sm:$0xff]
          %v2667 = vld [vmem:[#allocation8 + $0x248] sm:$0xff]
          %v2668 = vld [vmem:[#allocation8 + $0x250] sm:$0xff]
          %v2669 = vld [vmem:[#allocation8 + $0x270] sm:$0xff]
          %v2670 = vld [vmem:[#allocation8 + $0x278] sm:$0xff]
          %v2671 = vld [vmem:[#allocation8 + $0x298] sm:$0xff]
          %v2672 = vld [vmem:[#allocation8 + $0x2a0] sm:$0xff]
          %v2673 = vld [vmem:[#allocation8 + $0x2c0] sm:$0xff]
          %v2674 = vld [vmem:[#allocation8 + $0x2c8] sm:$0xff]
          %v2675 = vld [vmem:[#allocation8 + $0x2e8] sm:$0xff]
          %v2676 = vld [vmem:[#allocation8 + $0x2f0] sm:$0xff]
          %v2677 = vld [vmem:[#allocation8 + $0x310] sm:$0xff]
          %v2678 = vld [vmem:[#allocation8 + $0x318] sm:$0xff]
          %v2679 = vld [vmem:[#allocation8 + $0x338] sm:$0xff]
          %v2680 = vld [vmem:[#allocation8 + $0x340] sm:$0xff]
          %v2681 = vld [vmem:[#allocation8 + $0x360] sm:$0xff]
          %v2682 = vld [vmem:[#allocation8 + $0x368] sm:$0xff]
          %v2683 = vld [vmem:[#allocation8 + $0x388] sm:$0xff]
          %v2684 = vld [vmem:[#allocation8 + $0x390] sm:$0xff]
          %v2685 = vld [vmem:[#allocation8 + $0x3b0] sm:$0xff]
          %v2686 = vld [vmem:[#allocation8 + $0x3b8] sm:$0xff]
          %v2687 = vld [vmem:[#allocation8 + $0x3d8] sm:$0xff]
          %v2688 = vld [vmem:[#allocation8 + $0x3e0] sm:$0xff]
          %v2689 = vld [vmem:[#allocation8 + $0x400] sm:$0xff]
          %v2690 = vld [vmem:[#allocation8 + $0x408] sm:$0xff]
          %v2691 = vld [vmem:[#allocation8 + $0x428] sm:$0xff]
          %v2692 = vld [vmem:[#allocation8 + $0x430] sm:$0xff]
          %v2693 = vld [vmem:[#allocation8 + $0x450] sm:$0xff]
          %v2694 = vld [vmem:[#allocation8 + $0x458] sm:$0xff]
          %v2695 = vld [vmem:[#allocation8 + $0x478] sm:$0xff]
          %v2696 = vld [vmem:[#allocation8 + $0x480] sm:$0xff]
          %v2697 = vld [vmem:[#allocation8 + $0x4a0] sm:$0xff]
          %v2698 = vld [vmem:[#allocation8 + $0x4a8] sm:$0xff]
          %v2699 = vld [vmem:[#allocation8 + $0x4c8] sm:$0xff]
          %v2700 = vld [vmem:[#allocation8 + $0x4d0] sm:$0xff]
          %v2701 = vld [vmem:[#allocation8 + $0x4f0] sm:$0xff]
          %v2702 = vld [vmem:[#allocation8 + $0x4f8] sm:$0xff]
          %v2703 = vld [vmem:[#allocation9 + $0x6] sm:$0xf]
          %v2768 = vunpack.c.l.b16 %v2639
          %v2769 = vunpack.c.h.b16 %v2639
          %v2770 = vunpack.c.l.b16 %v2640
          %v2771 = vunpack.c.h.b16 %v2640
          %v2772 = vunpack.c.l.b16 %v2641
          %v2773 = vunpack.c.h.b16 %v2641
          %v2774 = vunpack.c.l.b16 %v2642
          %v2775 = vunpack.c.h.b16 %v2642
          %v2776 = vunpack.c.l.b16 %v2643
          %v2777 = vunpack.c.h.b16 %v2643
          %v2778 = vunpack.c.l.b16 %v2644
          %v2779 = vunpack.c.h.b16 %v2644
          %v2780 = vunpack.c.l.b16 %v2645
          %v2781 = vunpack.c.h.b16 %v2645
          %v2782 = vunpack.c.l.b16 %v2646
          %v2783 = vunpack.c.h.b16 %v2646
          %v2784 = vunpack.c.l.b16 %v2647
          %v2785 = vunpack.c.h.b16 %v2647
          %v2786 = vunpack.c.l.b16 %v2648
          %v2787 = vunpack.c.h.b16 %v2648
          %v2788 = vunpack.c.l.b16 %v2649
          %v2789 = vunpack.c.h.b16 %v2649
          %v2790 = vunpack.c.l.b16 %v2650
          %v2791 = vunpack.c.h.b16 %v2650
          %v2792 = vunpack.c.l.b16 %v2651
          %v2793 = vunpack.c.h.b16 %v2651
          %v2794 = vunpack.c.l.b16 %v2652
          %v2795 = vunpack.c.h.b16 %v2652
          %v2796 = vunpack.c.l.b16 %v2653
          %v2797 = vunpack.c.h.b16 %v2653
          %v2798 = vunpack.c.l.b16 %v2654
          %v2799 = vunpack.c.h.b16 %v2654
          %v2800 = vunpack.c.l.b16 %v2655
          %v2801 = vunpack.c.h.b16 %v2655
          %v2802 = vunpack.c.l.b16 %v2656
          %v2803 = vunpack.c.h.b16 %v2656
          %v2804 = vunpack.c.l.b16 %v2657
          %v2805 = vunpack.c.h.b16 %v2657
          %v2806 = vunpack.c.l.b16 %v2658
          %v2807 = vunpack.c.h.b16 %v2658
          %v2808 = vunpack.c.l.b16 %v2659
          %v2809 = vunpack.c.h.b16 %v2659
          %v2810 = vunpack.c.l.b16 %v2660
          %v2811 = vunpack.c.h.b16 %v2660
          %v2812 = vunpack.c.l.b16 %v2661
          %v2813 = vunpack.c.h.b16 %v2661
          %v2814 = vunpack.c.l.b16 %v2662
          %v2815 = vunpack.c.h.b16 %v2662
          %v2816 = vunpack.c.l.b16 %v2663
          %v2817 = vunpack.c.h.b16 %v2663
          %v2818 = vunpack.c.l.b16 %v2664
          %v2819 = vunpack.c.h.b16 %v2664
          %v2820 = vunpack.c.l.b16 %v2665
          %v2821 = vunpack.c.h.b16 %v2665
          %v2822 = vunpack.c.l.b16 %v2666
          %v2823 = vunpack.c.h.b16 %v2666
          %v2824 = vunpack.c.l.b16 %v2667
          %v2825 = vunpack.c.h.b16 %v2667
          %v2826 = vunpack.c.l.b16 %v2668
          %v2827 = vunpack.c.h.b16 %v2668
          %v2828 = vunpack.c.l.b16 %v2669
          %v2829 = vunpack.c.h.b16 %v2669
          %v2830 = vunpack.c.l.b16 %v2670
          %v2831 = vunpack.c.h.b16 %v2670
          %v2832 = vunpack.c.l.b16 %v2671
          %v2833 = vunpack.c.h.b16 %v2671
          %v2834 = vunpack.c.l.b16 %v2672
          %v2835 = vunpack.c.h.b16 %v2672
          %v2836 = vunpack.c.l.b16 %v2673
          %v2837 = vunpack.c.h.b16 %v2673
          %v2838 = vunpack.c.l.b16 %v2674
          %v2839 = vunpack.c.h.b16 %v2674
          %v2840 = vunpack.c.l.b16 %v2675
          %v2841 = vunpack.c.h.b16 %v2675
          %v2842 = vunpack.c.l.b16 %v2676
          %v2843 = vunpack.c.h.b16 %v2676
          %v2844 = vunpack.c.l.b16 %v2677
          %v2845 = vunpack.c.h.b16 %v2677
          %v2846 = vunpack.c.l.b16 %v2678
          %v2847 = vunpack.c.h.b16 %v2678
          %v2848 = vunpack.c.l.b16 %v2679
          %v2849 = vunpack.c.h.b16 %v2679
          %v2850 = vunpack.c.l.b16 %v2680
          %v2851 = vunpack.c.h.b16 %v2680
          %v2852 = vunpack.c.l.b16 %v2681
          %v2853 = vunpack.c.h.b16 %v2681
          %v2854 = vunpack.c.l.b16 %v2682
          %v2855 = vunpack.c.h.b16 %v2682
          %v2856 = vunpack.c.l.b16 %v2683
          %v2857 = vunpack.c.h.b16 %v2683
          %v2858 = vunpack.c.l.b16 %v2684
          %v2859 = vunpack.c.h.b16 %v2684
          %v2860 = vunpack.c.l.b16 %v2685
          %v2861 = vunpack.c.h.b16 %v2685
          %v2862 = vunpack.c.l.b16 %v2686
          %v2863 = vunpack.c.h.b16 %v2686
          %v2864 = vunpack.c.l.b16 %v2687
          %v2865 = vunpack.c.h.b16 %v2687
          %v2866 = vunpack.c.l.b16 %v2688
          %v2867 = vunpack.c.h.b16 %v2688
          %v2868 = vunpack.c.l.b16 %v2689
          %v2869 = vunpack.c.h.b16 %v2689
          %v2870 = vunpack.c.l.b16 %v2690
          %v2871 = vunpack.c.h.b16 %v2690
          %v2872 = vunpack.c.l.b16 %v2691
          %v2873 = vunpack.c.h.b16 %v2691
          %v2874 = vunpack.c.l.b16 %v2692
          %v2875 = vunpack.c.h.b16 %v2692
          %v2876 = vunpack.c.l.b16 %v2693
          %v2877 = vunpack.c.h.b16 %v2693
          %v2878 = vunpack.c.l.b16 %v2694
          %v2879 = vunpack.c.h.b16 %v2694
          %v2880 = vunpack.c.l.b16 %v2695
          %v2881 = vunpack.c.h.b16 %v2695
          %v2882 = vunpack.c.l.b16 %v2696
          %v2883 = vunpack.c.h.b16 %v2696
          %v2884 = vunpack.c.l.b16 %v2697
          %v2885 = vunpack.c.h.b16 %v2697
          %v2886 = vunpack.c.l.b16 %v2698
          %v2887 = vunpack.c.h.b16 %v2698
          %v2888 = vunpack.c.l.b16 %v2699
          %v2889 = vunpack.c.h.b16 %v2699
          %v2890 = vunpack.c.l.b16 %v2700
          %v2891 = vunpack.c.h.b16 %v2700
          %v2892 = vunpack.c.l.b16 %v2701
          %v2893 = vunpack.c.h.b16 %v2701
          %v2894 = vunpack.c.l.b16 %v2702
          %v2895 = vunpack.c.h.b16 %v2702
          %v2896 = vpack.c.b16 %v2772, %v2768
          %v2897 = vpack.c.b16 %v2773, %v2769
          %v2898 = vpack.c.b16 %v2774, %v2770
          %v2899 = vpack.c.b16 %v2775, %v2771
          %v2900 = vpack.c.b16 %v2780, %v2776
          %v2901 = vpack.c.b16 %v2781, %v2777
          %v2902 = vpack.c.b16 %v2782, %v2778
          %v2903 = vpack.c.b16 %v2783, %v2779
          %v2904 = vpack.c.b16 %v2788, %v2784
          %v2905 = vpack.c.b16 %v2789, %v2785
          %v2906 = vpack.c.b16 %v2790, %v2786
          %v2907 = vpack.c.b16 %v2791, %v2787
          %v2908 = vpack.c.b16 %v2796, %v2792
          %v2909 = vpack.c.b16 %v2797, %v2793
          %v2910 = vpack.c.b16 %v2798, %v2794
          %v2911 = vpack.c.b16 %v2799, %v2795
          %v2912 = vpack.c.b16 %v2804, %v2800
          %v2913 = vpack.c.b16 %v2805, %v2801
          %v2914 = vpack.c.b16 %v2806, %v2802
          %v2915 = vpack.c.b16 %v2807, %v2803
          %v2916 = vpack.c.b16 %v2812, %v2808
          %v2917 = vpack.c.b16 %v2813, %v2809
          %v2918 = vpack.c.b16 %v2814, %v2810
          %v2919 = vpack.c.b16 %v2815, %v2811
          %v2920 = vpack.c.b16 %v2820, %v2816
          %v2921 = vpack.c.b16 %v2821, %v2817
          %v2922 = vpack.c.b16 %v2822, %v2818
          %v2923 = vpack.c.b16 %v2823, %v2819
          %v2924 = vpack.c.b16 %v2828, %v2824
          %v2925 = vpack.c.b16 %v2829, %v2825
          %v2926 = vpack.c.b16 %v2830, %v2826
          %v2927 = vpack.c.b16 %v2831, %v2827
          %v2928 = vpack.c.b16 %v2836, %v2832
          %v2929 = vpack.c.b16 %v2837, %v2833
          %v2930 = vpack.c.b16 %v2838, %v2834
          %v2931 = vpack.c.b16 %v2839, %v2835
          %v2932 = vpack.c.b16 %v2844, %v2840
          %v2933 = vpack.c.b16 %v2845, %v2841
          %v2934 = vpack.c.b16 %v2846, %v2842
          %v2935 = vpack.c.b16 %v2847, %v2843
          %v2936 = vpack.c.b16 %v2852, %v2848
          %v2937 = vpack.c.b16 %v2853, %v2849
          %v2938 = vpack.c.b16 %v2854, %v2850
          %v2939 = vpack.c.b16 %v2855, %v2851
          %v2940 = vpack.c.b16 %v2860, %v2856
          %v2941 = vpack.c.b16 %v2861, %v2857
          %v2942 = vpack.c.b16 %v2862, %v2858
          %v2943 = vpack.c.b16 %v2863, %v2859
          %v2944 = vpack.c.b16 %v2868, %v2864
          %v2945 = vpack.c.b16 %v2869, %v2865
          %v2946 = vpack.c.b16 %v2870, %v2866
          %v2947 = vpack.c.b16 %v2871, %v2867
          %v2948 = vpack.c.b16 %v2876, %v2872
          %v2949 = vpack.c.b16 %v2877, %v2873
          %v2950 = vpack.c.b16 %v2878, %v2874
          %v2951 = vpack.c.b16 %v2879, %v2875
          %v2952 = vpack.c.b16 %v2884, %v2880
          %v2953 = vpack.c.b16 %v2885, %v2881
          %v2954 = vpack.c.b16 %v2886, %v2882
          %v2955 = vpack.c.b16 %v2887, %v2883
          %v2956 = vpack.c.b16 %v2892, %v2888
          %v2957 = vpack.c.b16 %v2893, %v2889
          %v2958 = vpack.c.b16 %v2894, %v2890
          %v2959 = vpack.c.b16 %v2895, %v2891
          %v3025 = vlaneseq
          %v3026 = vshrl.u32 %v3025, 7
          %v3027 = vsub.s32 0, %v3026
          %v3028 = vrot.slane %v2703, %v3027
          %v3029 = vlaneseq
          %v3030 = vshrl.u32 %v3029, 7
          %v3031 = vsub.s32 1, %v3030
          %v3032 = vrot.slane %v2703, %v3031
          %v3033 = vlaneseq
          %v3034 = vshrl.u32 %v3033, 7
          %v3035 = vsub.s32 2, %v3034
          %v3036 = vrot.slane %v2703, %v3035
          %v3037 = vlaneseq
          %v3038 = vshrl.u32 %v3037, 7
          %v3039 = vsub.s32 3, %v3038
          %v3040 = vrot.slane %v2703, %v3039
          %3045 = vmatprep.subr.bf16.mxu0 %v2897
          %3046 = vmatpush1.bf16.msra.mxu0 %v2896
          %3047 = vmatprep.subr.bf16.mxu0 %v2901
          %3048 = vmatpush1.bf16.msra.mxu0 %v2900
          %3049 = vmatprep.subr.bf16.mxu0 %v2905
          %3050 = vmatpush1.bf16.msra.mxu0 %v2904
          %3051 = vmatprep.subr.bf16.mxu0 %v2909
          %3052 = vmatpush1.bf16.msra.mxu0 %v2908
          %3053 = vmatprep.subr.bf16.mxu0 %v2913
          %3054 = vmatpush1.bf16.msra.mxu0 %v2912
          %3055 = vmatprep.subr.bf16.mxu0 %v2917
          %3056 = vmatpush1.bf16.msra.mxu0 %v2916
          %3057 = vmatprep.subr.bf16.mxu0 %v2921
          %3058 = vmatpush1.bf16.msra.mxu0 %v2920
          %3059 = vmatprep.subr.bf16.mxu0 %v2925
          %3060 = vmatpush1.bf16.msra.mxu0 %v2924
          %3061 = vmatprep.subr.bf16.mxu0 %v2929
          %3062 = vmatpush1.bf16.msra.mxu0 %v2928
          %3063 = vmatprep.subr.bf16.mxu0 %v2933
          %3064 = vmatpush1.bf16.msra.mxu0 %v2932
          %3065 = vmatprep.subr.bf16.mxu0 %v2937
          %3066 = vmatpush1.bf16.msra.mxu0 %v2936
          %3067 = vmatprep.subr.bf16.mxu0 %v2941
          %3068 = vmatpush1.bf16.msra.mxu0 %v2940
          %3069 = vmatprep.subr.bf16.mxu0 %v2945
          %3070 = vmatpush1.bf16.msra.mxu0 %v2944
          %3071 = vmatprep.subr.bf16.mxu0 %v2949
          %3072 = vmatpush1.bf16.msra.mxu0 %v2948
          %3073 = vmatprep.subr.bf16.mxu0 %v2953
          %3074 = vmatpush1.bf16.msra.mxu0 %v2952
          %3075 = vmatprep.subr.bf16.mxu0 %v2957
          %3076 = vmatpush1.bf16.msra.mxu0 %v2956
          %3077 = vmatprep.mubr.bf16.mxu0 %v2638
          %3078 = vmatmul.mubr.bf16.gmra.mrb[0].mxu0 %v2637
          %v3079 = vpop.f32.mrb[0].mxu0
          %v3080 = vadd.f32 %v3028, %v3079
          %v3081 = vpop.f32.mrb[0].mxu0
          %v3082 = vadd.f32 %v3032, %v3081
          %v3083 = vpop.f32.mrb[0].mxu0
          %v3084 = vpop.f32.mrb[0].mxu0
          %3085 = vdwg.mxu0
          %3086 = vmatprep.subr.bf16.mxu0 %v2899
          %3087 = vmatpush1.bf16.msra.mxu0 %v2898
          %3088 = vmatprep.subr.bf16.mxu0 %v2903
          %3089 = vmatpush1.bf16.msra.mxu0 %v2902
          %3090 = vmatprep.subr.bf16.mxu0 %v2907
          %3091 = vmatpush1.bf16.msra.mxu0 %v2906
          %3092 = vmatprep.subr.bf16.mxu0 %v2911
          %3093 = vmatpush1.bf16.msra.mxu0 %v2910
          %3094 = vmatprep.subr.bf16.mxu0 %v2915
          %3095 = vmatpush1.bf16.msra.mxu0 %v2914
          %3096 = vmatprep.subr.bf16.mxu0 %v2919
          %3097 = vmatpush1.bf16.msra.mxu0 %v2918
          %3098 = vmatprep.subr.bf16.mxu0 %v2923
          %3099 = vmatpush1.bf16.msra.mxu0 %v2922
          %3100 = vmatprep.subr.bf16.mxu0 %v2927
          %3101 = vmatpush1.bf16.msra.mxu0 %v2926
          %3102 = vmatprep.subr.bf16.mxu0 %v2931
          %3103 = vmatpush1.bf16.msra.mxu0 %v2930
          %3104 = vmatprep.subr.bf16.mxu0 %v2935
          %3105 = vmatpush1.bf16.msra.mxu0 %v2934
          %3106 = vmatprep.subr.bf16.mxu0 %v2939
          %3107 = vmatpush1.bf16.msra.mxu0 %v2938
          %3108 = vmatprep.subr.bf16.mxu0 %v2943
          %3109 = vmatpush1.bf16.msra.mxu0 %v2942
          %3110 = vmatprep.subr.bf16.mxu0 %v2947
          %3111 = vmatpush1.bf16.msra.mxu0 %v2946
          %3112 = vmatprep.subr.bf16.mxu0 %v2951
          %3113 = vmatpush1.bf16.msra.mxu0 %v2950
          %3114 = vmatprep.subr.bf16.mxu0 %v2955
          %3115 = vmatpush1.bf16.msra.mxu0 %v2954
          %3116 = vmatprep.subr.bf16.mxu0 %v2959
          %3117 = vmatpush1.bf16.msra.mxu0 %v2958
          %3118 = vmatprep.mubr.bf16.mxu0 %v2638
          %3119 = vmatmul.mubr.bf16.gmra.mrb[0].mxu0 %v2637
          %v3120 = vpop.f32.mrb[0].mxu0
          %v3121 = vadd.f32 %v3036, %v3120
          %v3122 = vpop.f32.mrb[0].mxu0
          %v3123 = vadd.f32 %v3040, %v3122
          %v3124 = vpop.f32.mrb[0].mxu0
          %v3125 = vpop.f32.mrb[0].mxu0
          %3126 = vdwg.mxu0
          %v3131 = vcombine.low %v3080, %v3082
          %v3132 = vcombine.low %v3121, %v3123
          %v3134 = vunpack.c.l.s4 1966171168
          %v3135 = vunpack.c.0.s8 %v3134
          %v3136 = vlaneseq
          %v3137 = vshrl.u32 %v3136, 7
          %v3138 = vsub.s32 %v3135, %v3137
          %v3139 = vrot.slane %v3131, %v3138
          %v3141 = vunpack.c.l.s4 1966171168
          %v3142 = vunpack.c.0.s8 %v3141
          %v3143 = vlaneseq
          %v3144 = vshrl.u32 %v3143, 7
          %v3145 = vsub.s32 %v3142, %v3144
          %v3146 = vrot.slane %v3132, %v3145
          %v3147 = vcombine.low %v3139, %v3146
          %v3149 = vunpack.c.l.s4 1966171168
          %v3150 = vunpack.c.0.s8 %v3149
          %v3151 = vlaneseq
          %v3152 = vshrl.u32 %v3151, 7
          %v3153 = vsub.s32 %v3150, %v3152
          %v3154 = vrot.slane %v3147, %v3153
          %3156 = vst.msk [vmem:[%s5] sm:$0xf] %vm2386, %v3154
        $region60: #{simple_restriction_forward.1} parent=39 // pred_fallthru
          _
        // Predicated region
        $region61: #{simple_restriction_forward.1} parent=39 // pred_check
          %p3157 = pneg %p154
        $region62: #{simple_restriction_forward.1} parent=39 // pred_check_branch
          %3159 = sbr.rel (%p3157) target = $region64
        $region63: #{simple_restriction_forward.1} parent=39 // pred_region
          _
        $region64: #{simple_restriction_forward.1} parent=39 // pred_fallthru
          _
        // Predicated region
        $region65: #{simple_restriction_forward.1} parent=39 // pred_check
          %p3160 = pneg %p175
        $region66: #{simple_restriction_forward.1} parent=39 // pred_check_branch
          %3162 = sbr.rel (%p3160) target = $region68
        $region67: #{simple_restriction_forward.1} parent=39 // pred_region
          %s3164 = ssub.s32 64, 64
          %3165 = vsyncadd [#allocation5], %s3164
          %s3167 = sshll.u32 [#allocation11], 4
          %s3168 = int_to_ptr.vmem [resolvable:$true] %s3167
          %3170 = dma.vmem_to_hbm [thread:$0]  %s3168, 64, %s6, [#allocation5]
        $region68: #{simple_restriction_forward.1} parent=39 // pred_fallthru
          _
        // Predicated region
        $region69: #{simple_restriction_forward.1} parent=39 // pred_check
          %p3171 = pneg %p154
        $region70: #{simple_restriction_forward.1} parent=39 // pred_check_branch
          %3173 = sbr.rel (%p3171) target = $region72
        $region71: #{simple_restriction_forward.1} parent=39 // pred_region
          _
        $region72: #{simple_restriction_forward.1} parent=39 // pred_fallthru
          _
        // Predicated region
        $region73: #{simple_restriction_forward.1} parent=39 // pred_check
          %p3174 = pneg %p175
        $region74: #{simple_restriction_forward.1} parent=39 // pred_check_branch
          %3176 = sbr.rel (%p3174) target = $region76
        $region75: #{simple_restriction_forward.1} parent=39 // pred_region
          %3177 = dma.done [#allocation5], 64
        $region76: #{simple_restriction_forward.1} parent=39 // pred_fallthru
          _
      $region40: #{simple_restriction_forward.1} parent=5 // pred_fallthru
        _
      %p3178 = scmp.le.s32.totalorder 2, %s21
      // Predicated region
      $region77: #{simple_restriction_forward.1} parent=5 // pred_check
        %p3179 = pneg %p3178
      $region78: #{simple_restriction_forward.1} parent=5 // pred_check_branch
        %3181 = sbr.rel (%p3179) target = $region80
      $region79: #{simple_restriction_forward.1} parent=5 // pred_region
        %s3182 = ssub.s32 %s21, 2
      $region80: #{simple_restriction_forward.1} parent=5 // pred_fallthru
        _
    $region6: #{simple_restriction_forward.1} parent=1 // loop_footer
      %s25 = sadd.s32 1, %s21
    $region7: #{simple_restriction_forward.1} parent=1 // loop_footer_branch
      %20 = sbr.rel target = $region3
    $region8: #{simple_restriction_forward.1} parent=1 // loop_exit
      _
    %3183 = vsyncpa [#allocation4], 1
    %s3184 = scalar_lea.sflag [#allocation4], 1
    %3185 = vsyncpa %s3184, 1
    %3186 = vsyncpa [#allocation7], 1
    %s3187 = scalar_lea.sflag [#allocation7], 1
    %3188 = vsyncpa %s3187, 1
    %3189 = vsyncpa [#allocation10], 1
    %3190 = vsyncpa [#allocation5], 1
    %s3191 = scalar_lea.sflag [#allocation5], 1
    %3192 = vsyncpa %s3191, 1

</llo_original>
